<compile_context>
chip_gen: v7x
topology: tpu7x:2x2x1
jax: 0.10.0
libtpu: 0.0.40
codegen_flags: <defaults>
</compile_context>

<pallas_src>
import jax
import jax.numpy as jnp
from jax.experimental import pallas as pl
from jax.experimental.pallas import tpu as pltpu

H1 = 128        # first-layer width of every encoder
H2 = 128        # fused encoder-head width (3*32 = 96 -> 128, zero padded)
LAT_PAD = 128   # latent 64 -> 128, zero padded


def _round_up(n, m):
    return ((n + m - 1) // m) * m


def _cdiv(a, b):
    return -(-a // b)


# --------------------------------------------------------------------------- #
# Kernel
# --------------------------------------------------------------------------- #
def _proprio_kernel(
    x_in_ref, x_leg_ref, x_ft_ref,
    w_in1_ref, w_leg1_ref, w_ft1_ref,
    w2a_ref, w2b_ref, w2c_ref, b2_ref,
    w_fc1_ref, b_fc1_ref, w_fc2_ref, b_fc2_ref,
    out_ref,
):
    f32 = jnp.float32
    bf16 = jnp.bfloat16

    def first_layer(x_ref, w_ref):
        # Linear(no bias) -> ReLU -> (Dropout: identity in eval mode).
        # Inputs arrive as raw f32 tiles; cast to bf16 here (saves the HBM
        # round trip), MXU matmul accumulates in f32.
        x = x_ref[...].astype(bf16)
        h = jnp.dot(x, w_ref[...], preferred_element_type=f32)
        return jnp.maximum(h, 0.0)                       # (TB, 128) f32

    h_in = first_layer(x_in_ref, w_in1_ref)
    h_leg = first_layer(x_leg_ref, w_leg1_ref)
    h_ft = first_layer(x_ft_ref, w_ft1_ref)

    # Fused encoder heads + concat: three 128x128 matmuls summed into one f32
    # accumulator.  Each weight block has a disjoint nonzero output-column range
    # (0:32 / 32:64 / 64:96), so the sum equals the concat of the three heads —
    # no (TB, 384) lane-concat slab is materialized.
    feats = jnp.dot(h_in, w2a_ref[...], preferred_element_type=f32)
    feats = feats + jnp.dot(h_leg, w2b_ref[...], preferred_element_type=f32)
    feats = feats + jnp.dot(h_ft, w2c_ref[...], preferred_element_type=f32)
    feats = jnp.maximum(feats + b2_ref[...], 0.0)        # (TB, 128) f32

    # Fusion MLP, kept entirely in f32 (tiny FLOP fraction; HBM-bound kernel).
    h = jnp.dot(feats, w_fc1_ref[...], preferred_element_type=f32) + b_fc1_ref[...]
    h = jnp.maximum(h, 0.0)                              # (TB, 128) f32
    f = jnp.dot(h, w_fc2_ref[...], preferred_element_type=f32) + b_fc2_ref[...]

    # F.normalize(dim=-1): x / max(||x||_2, 1e-12), via rsqrt (EUP slot).
    # Padded columns 64..127 are exactly zero, so the norm is unchanged.
    s = jnp.sum(f * f, axis=-1, keepdims=True)
    out_ref[...] = f * jax.lax.rsqrt(jnp.maximum(s, 1e-24))


# --------------------------------------------------------------------------- #
# Parameters
# --------------------------------------------------------------------------- #
def init_params(latent_size=64, seed=0):
    """Deterministic f32 parameter init (shapes match the PyTorch module)."""
    key = jax.random.PRNGKey(seed)
    ks = jax.random.split(key, 13)

    def lin_w(k, fan_in, fan_out):
        bound = 1.0 / jnp.sqrt(fan_in)
        return jax.random.uniform(k, (fan_in, fan_out), jnp.float32, -bound, bound)

    def lin_b(k, fan_in, fan_out):
        bound = 1.0 / jnp.sqrt(fan_in)
        return jax.random.uniform(k, (1, fan_out), jnp.float32, -bound, bound)

    return dict(
        w_in1=lin_w(ks[0], 201 * 6, 128),
        w_in2=lin_w(ks[1], 128, 32), b_in2=lin_b(ks[2], 128, 32),
        w_leg1=lin_w(ks[3], 900, 128),
        w_leg2=lin_w(ks[4], 128, 32), b_leg2=lin_b(ks[5], 128, 32),
        w_ft1=lin_w(ks[6], 500, 128),
        w_ft2=lin_w(ks[7], 128, 32), b_ft2=lin_b(ks[8], 128, 32),
        w_fc1=lin_w(ks[9], 96, latent_size), b_fc1=lin_b(ks[10], 96, latent_size),
        w_fc2=lin_w(ks[11], latent_size, latent_size),
        b_fc2=lin_b(ks[12], latent_size, latent_size),
    )


def prepare_params(params, latent_size=64):
    """One-time prep: bf16 first-layer weights (true K, no row padding),
    per-encoder head blocks with disjoint output columns, 128-lane-padded
    f32 fusion MLP (padded rows/cols exactly zero)."""
    assert latent_size <= LAT_PAD
    f32, bf16 = jnp.float32, jnp.bfloat16

    pp = {
        "w_in1": params["w_in1"].astype(bf16),    # (1206, 128)
        "w_leg1": params["w_leg1"].astype(bf16),  # (900, 128)
        "w_ft1": params["w_ft1"].astype(bf16),    # (500, 128)
    }

    # Encoder head blocks: (128, 128) each, nonzero columns at the concat offset.
    pp["w2a"] = jnp.zeros((H1, H2), f32).at[:, 0:32].set(params["w_in2"])
    pp["w2b"] = jnp.zeros((H1, H2), f32).at[:, 32:64].set(params["w_leg2"])
    pp["w2c"] = jnp.zeros((H1, H2), f32).at[:, 64:96].set(params["w_ft2"])
    pp["b2"] = (jnp.zeros((1, H2), f32)
                .at[:, 0:32].set(params["b_in2"])
                .at[:, 32:64].set(params["b_leg2"])
                .at[:, 64:96].set(params["b_ft2"]))

    # Fusion MLP padded to 128x128 (f32); padded rows/cols are zero.
    pp["w_fc1"] = jnp.zeros((H2, LAT_PAD), f32).at[0:96, 0:latent_size].set(params["w_fc1"])
    pp["b_fc1"] = jnp.zeros((1, LAT_PAD), f32).at[:, 0:latent_size].set(params["b_fc1"])
    pp["w_fc2"] = (jnp.zeros((LAT_PAD, LAT_PAD), f32)
                   .at[0:latent_size, 0:latent_size].set(params["w_fc2"]))
    pp["b_fc2"] = jnp.zeros((1, LAT_PAD), f32).at[:, 0:latent_size].set(params["b_fc2"])
    return pp


# --------------------------------------------------------------------------- #
# Batch-tile selection
# --------------------------------------------------------------------------- #
def _pick_batch_tile(B, tile_b):
    """Tile the batch with no input padding/copies.

    Rules: tb is either a multiple of 8 (f32 sublane) or equal to B (full dim);
    prefer >= 2 grid steps when the batch permits (v7x 2-TensorCore megacore);
    the last block may be ragged — Pallas masks its writeback."""
    if B < 16:
        return B, 1                      # single block == full batch dim (legal)
    tb = min(tile_b, (B // 8) * 8)
    if _cdiv(B, tb) < 2:
        tb = min(_round_up(_cdiv(B, 2), 8), (B // 8) * 8)
    return tb, _cdiv(B, tb)


# --------------------------------------------------------------------------- #
# Forward wrapper
# --------------------------------------------------------------------------- #
def proprioception_forward(inertial, leg, feet, prepared, latent_size=64, tile_b=512):
    B = inertial.shape[0]
    # Flatten only (contiguous reshape == bitcast, no HBM copy, no pad/cast).
    x_in = inertial.reshape(B, -1).astype(jnp.float32)
    x_leg = leg.reshape(B, -1).astype(jnp.float32)
    x_ft = feet.reshape(B, -1).astype(jnp.float32)
    k_in, k_leg, k_ft = x_in.shape[1], x_leg.shape[1], x_ft.shape[1]   # 1206/900/500

    tb, grid_len = _pick_batch_tile(B, tile_b)

    def x_spec(f):
        # Last dim == full array dim (legal even when not a 128 multiple).
        return pl.BlockSpec((tb, f), lambda i: (i, 0))

    def w_spec(shape):
        # Constant block index -> fetched once, VMEM-resident across grid steps.
        return pl.BlockSpec(shape, lambda i: (0, 0))

    in_specs = [
        x_spec(k_in), x_spec(k_leg), x_spec(k_ft),
        w_spec((k_in, H1)), w_spec((k_leg, H1)), w_spec((k_ft, H1)),
        w_spec((H1, H2)), w_spec((H1, H2)), w_spec((H1, H2)), w_spec((1, H2)),
        w_spec((H2, LAT_PAD)), w_spec((1, LAT_PAD)),
        w_spec((LAT_PAD, LAT_PAD)), w_spec((1, LAT_PAD)),
    ]
    out_spec = pl.BlockSpec((tb, LAT_PAD), lambda i: (i, 0))

    # Scoped-VMEM budget: double-buffered f32 input tiles dominate; v5e's 16 MiB
    # default is too small at tb=512, so raise it explicitly (cap < v7x's 64 MiB).
    x_block_bytes = tb * (k_in + k_leg + k_ft) * 4
    vmem_limit = int(max(32 << 20, min(4 * x_block_bytes + (12 << 20), 56 << 20)))

    k_total = k_in + k_leg + k_ft
    flops_per_row = 2 * (k_total * H1 + 3 * H1 * H2 + H2 * LAT_PAD + LAT_PAD * LAT_PAD)
    weight_bytes = (2 * k_total * H1
                    + 4 * (3 * H1 * H2 + H2 * LAT_PAD + LAT_PAD * LAT_PAD + H2 + 2 * LAT_PAD))
    io_bytes = B * (k_total * 4 + LAT_PAD * 4)
    cost = pl.CostEstimate(flops=flops_per_row * B,
                           transcendentals=B,
                           bytes_accessed=io_bytes + weight_bytes)

    out = pl.pallas_call(
        _proprio_kernel,
        out_shape=jax.ShapeDtypeStruct((B, LAT_PAD), jnp.float32),
        grid=(grid_len,),
        in_specs=in_specs,
        out_specs=out_spec,
        compiler_params=pltpu.CompilerParams(
            dimension_semantics=("parallel",),
            vmem_limit_bytes=vmem_limit,
        ),
        cost_estimate=cost,
    )(x_in, x_leg, x_ft,
      prepared["w_in1"], prepared["w_leg1"], prepared["w_ft1"],
      prepared["w2a"], prepared["w2b"], prepared["w2c"], prepared["b2"],
      prepared["w_fc1"], prepared["b_fc1"], prepared["w_fc2"], prepared["b_fc2"])

    return out[:, :latent_size]


# --------------------------------------------------------------------------- #
# References for correctness checks
# --------------------------------------------------------------------------- #
def _reference_forward_f32(inertial, leg, feet, params):
    """Pure-JAX f32 reference (original module semantics, eval-mode dropout)."""
    B = inertial.shape[0]
    hi = jax.lax.Precision.HIGHEST

    def enc(x, w1, w2, b2):
        h = jnp.maximum(jnp.dot(x.reshape(B, -1), w1, precision=hi), 0.0)
        return jnp.maximum(jnp.dot(h, w2, precision=hi) + b2, 0.0)

    e_i = enc(inertial, params["w_in1"], params["w_in2"], params["b_in2"])
    e_l = enc(leg, params["w_leg1"], params["w_leg2"], params["b_leg2"])
    e_f = enc(feet, params["w_ft1"], params["w_ft2"], params["b_ft2"])
    feats = jnp.concatenate([e_i, e_l, e_f], axis=1)
    h = jnp.maximum(jnp.dot(feats, params["w_fc1"], precision=hi) + params["b_fc1"], 0.0)
    f = jnp.dot(h, params["w_fc2"], precision=hi) + params["b_fc2"]
    norm = jnp.sqrt(jnp.sum(f * f, axis=-1, keepdims=True))
    return f / jnp.maximum(norm, 1e-12)


def _reference_forward_kernel_math(inertial, leg, feet, prepared, latent_size=64):
    """Pure-JAX replica of the exact kernel math (bf16 first layer, f32 rest)."""
    B = inertial.shape[0]
    f32, bf16 = jnp.float32, jnp.bfloat16
    hi = jax.lax.Precision.HIGHEST

    def first(x, w):
        h = jnp.dot(x.reshape(B, -1).astype(bf16), w, preferred_element_type=f32)
        return jnp.maximum(h, 0.0)

    h_in = first(inertial, prepared["w_in1"])
    h_leg = first(leg, prepared["w_leg1"])
    h_ft = first(feet, prepared["w_ft1"])
    feats = (jnp.dot(h_in, prepared["w2a"], precision=hi)
             + jnp.dot(h_leg, prepared["w2b"], precision=hi)
             + jnp.dot(h_ft, prepared["w2c"], precision=hi))
    feats = jnp.maximum(feats + prepared["b2"], 0.0)
    h = jnp.maximum(jnp.dot(feats, prepared["w_fc1"], precision=hi) + prepared["b_fc1"], 0.0)
    f = jnp.dot(h, prepared["w_fc2"], precision=hi) + prepared["b_fc2"]
    s = jnp.sum(f * f, axis=-1, keepdims=True)
    return (f * jax.lax.rsqrt(jnp.maximum(s, 1e-24)))[:, :latent_size]


# --------------------------------------------------------------------------- #
# Self-test
# --------------------------------------------------------------------------- #
if __name__ == "__main__":
    B = 2
    latent_size = 64
    key = jax.random.PRNGKey(0)
    k1, k2, k3 = jax.random.split(key, 3)

    inertial = jax.random.normal(k1, (B, 201, 6), jnp.float32)
    leg = jax.random.normal(k2, (B, 900), jnp.float32)
    feet = jax.random.normal(k3, (B, 500), jnp.float32)

    params = init_params(latent_size=latent_size, seed=0)
    prepared = prepare_params(params, latent_size=latent_size)

    out = proprioception_forward(inertial, leg, feet, prepared, latent_size=latent_size)
    out = jax.block_until_ready(out)
    assert out.shape == (B, latent_size)
    assert bool(jnp.all(jnp.isfinite(out)))

    # Tight check: kernel vs a pure-JAX replica of the same bf16/f32 math.
    ref_km = _reference_forward_kernel_math(inertial, leg, feet, prepared, latent_size)
    assert jnp.allclose(out, ref_km, atol=5e-3, rtol=5e-3), "mismatch vs kernel-math reference"

    # Semantics check: kernel vs the original f32 module math (bf16 first-layer noise only).
    ref_f32 = _reference_forward_f32(inertial, leg, feet, params)
    assert jnp.allclose(out, ref_f32, atol=3e-2, rtol=3e-2), "mismatch vs f32 reference"

    # Row norms must be 1 (F.normalize semantics).
    assert jnp.allclose(jnp.linalg.norm(out, axis=-1), 1.0, atol=1e-3)

    print("KERNEL_OK")
</pallas_src>

<mosaic_0001>
module attributes {stable_mosaic.version = 11 : i64} {
  func.func @_proprio_kernel(%arg0: i32, %arg1: memref<2x1206xf32, #tpu.memory_space<vmem>>, %arg2: memref<2x900xf32, #tpu.memory_space<vmem>>, %arg3: memref<2x500xf32, #tpu.memory_space<vmem>>, %arg4: memref<1206x128xbf16, #tpu.memory_space<vmem>>, %arg5: memref<900x128xbf16, #tpu.memory_space<vmem>>, %arg6: memref<500x128xbf16, #tpu.memory_space<vmem>>, %arg7: memref<128x128xf32, #tpu.memory_space<vmem>>, %arg8: memref<128x128xf32, #tpu.memory_space<vmem>>, %arg9: memref<128x128xf32, #tpu.memory_space<vmem>>, %arg10: memref<1x128xf32, #tpu.memory_space<vmem>>, %arg11: memref<128x128xf32, #tpu.memory_space<vmem>>, %arg12: memref<1x128xf32, #tpu.memory_space<vmem>>, %arg13: memref<128x128xf32, #tpu.memory_space<vmem>>, %arg14: memref<1x128xf32, #tpu.memory_space<vmem>>, %arg15: memref<2x128xf32, #tpu.memory_space<vmem>>) attributes {dimension_semantics = [#tpu.dimension_semantics<parallel>], iteration_bounds = array<i64: 1>, scalar_prefetch = 0 : i64, scratch_operands = 0 : i64, tpu.core_type = #tpu.core_type<tc>, window_params = [{transform_indices = @transform_0, window_bounds = array<i64: 2, 1206>}, {transform_indices = @transform_1, window_bounds = array<i64: 2, 900>}, {transform_indices = @transform_2, window_bounds = array<i64: 2, 500>}, {pipeline_mode = #tpu.pipeline_mode<synchronous>, transform_indices = @transform_3, window_bounds = array<i64: 1206, 128>}, {pipeline_mode = #tpu.pipeline_mode<synchronous>, transform_indices = @transform_4, window_bounds = array<i64: 900, 128>}, {pipeline_mode = #tpu.pipeline_mode<synchronous>, transform_indices = @transform_5, window_bounds = array<i64: 500, 128>}, {pipeline_mode = #tpu.pipeline_mode<synchronous>, transform_indices = @transform_6, window_bounds = array<i64: 128, 128>}, {pipeline_mode = #tpu.pipeline_mode<synchronous>, transform_indices = @transform_7, window_bounds = array<i64: 128, 128>}, {pipeline_mode = #tpu.pipeline_mode<synchronous>, transform_indices = @transform_8, window_bounds = array<i64: 128, 128>}, {pipeline_mode = #tpu.pipeline_mode<synchronous>, transform_indices = @transform_9, window_bounds = array<i64: 1, 128>}, {pipeline_mode = #tpu.pipeline_mode<synchronous>, transform_indices = @transform_10, window_bounds = array<i64: 128, 128>}, {pipeline_mode = #tpu.pipeline_mode<synchronous>, transform_indices = @transform_11, window_bounds = array<i64: 1, 128>}, {pipeline_mode = #tpu.pipeline_mode<synchronous>, transform_indices = @transform_12, window_bounds = array<i64: 128, 128>}, {pipeline_mode = #tpu.pipeline_mode<synchronous>, transform_indices = @transform_13, window_bounds = array<i64: 1, 128>}, {transform_indices = @transform_14, window_bounds = array<i64: 2, 128>}]} {
    %c0 = arith.constant 0 : index
    %c0_0 = arith.constant 0 : index
    %0 = vector.load %arg1[%c0, %c0_0] : memref<2x1206xf32, #tpu.memory_space<vmem>>, vector<2x1206xf32>
    %1 = arith.truncf %0 : vector<2x1206xf32> to vector<2x1206xbf16>
    %c0_1 = arith.constant 0 : index
    %c0_2 = arith.constant 0 : index
    %2 = vector.load %arg4[%c0_1, %c0_2] : memref<1206x128xbf16, #tpu.memory_space<vmem>>, vector<1206x128xbf16>
    %cst = arith.constant dense<0.000000e+00> : vector<2x128xf32>
    %3 = tpu.matmul %1, %2, %cst {dimension_numbers = #tpu.dot_dimension_numbers<[1], [0], [0], [1], [0, 0, 1, 1], [], []>} : vector<2x1206xbf16>, vector<1206x128xbf16>, vector<2x128xf32> -> vector<2x128xf32>
    %cst_3 = arith.constant 0.000000e+00 : f32
    %4 = vector.broadcast %cst_3 : f32 to vector<2x128xf32>
    %5 = arith.maximumf %3, %4 : vector<2x128xf32>
    %c0_4 = arith.constant 0 : index
    %c0_5 = arith.constant 0 : index
    %6 = vector.load %arg2[%c0_4, %c0_5] : memref<2x900xf32, #tpu.memory_space<vmem>>, vector<2x900xf32>
    %7 = arith.truncf %6 : vector<2x900xf32> to vector<2x900xbf16>
    %c0_6 = arith.constant 0 : index
    %c0_7 = arith.constant 0 : index
    %8 = vector.load %arg5[%c0_6, %c0_7] : memref<900x128xbf16, #tpu.memory_space<vmem>>, vector<900x128xbf16>
    %cst_8 = arith.constant dense<0.000000e+00> : vector<2x128xf32>
    %9 = tpu.matmul %7, %8, %cst_8 {dimension_numbers = #tpu.dot_dimension_numbers<[1], [0], [0], [1], [0, 0, 1, 1], [], []>} : vector<2x900xbf16>, vector<900x128xbf16>, vector<2x128xf32> -> vector<2x128xf32>
    %cst_9 = arith.constant 0.000000e+00 : f32
    %10 = vector.broadcast %cst_9 : f32 to vector<2x128xf32>
    %11 = arith.maximumf %9, %10 : vector<2x128xf32>
    %c0_10 = arith.constant 0 : index
    %c0_11 = arith.constant 0 : index
    %12 = vector.load %arg3[%c0_10, %c0_11] : memref<2x500xf32, #tpu.memory_space<vmem>>, vector<2x500xf32>
    %13 = arith.truncf %12 : vector<2x500xf32> to vector<2x500xbf16>
    %c0_12 = arith.constant 0 : index
    %c0_13 = arith.constant 0 : index
    %14 = vector.load %arg6[%c0_12, %c0_13] : memref<500x128xbf16, #tpu.memory_space<vmem>>, vector<500x128xbf16>
    %cst_14 = arith.constant dense<0.000000e+00> : vector<2x128xf32>
    %15 = tpu.matmul %13, %14, %cst_14 {dimension_numbers = #tpu.dot_dimension_numbers<[1], [0], [0], [1], [0, 0, 1, 1], [], []>} : vector<2x500xbf16>, vector<500x128xbf16>, vector<2x128xf32> -> vector<2x128xf32>
    %cst_15 = arith.constant 0.000000e+00 : f32
    %16 = vector.broadcast %cst_15 : f32 to vector<2x128xf32>
    %17 = arith.maximumf %15, %16 : vector<2x128xf32>
    %c0_16 = arith.constant 0 : index
    %c0_17 = arith.constant 0 : index
    %18 = vector.load %arg7[%c0_16, %c0_17] : memref<128x128xf32, #tpu.memory_space<vmem>>, vector<128x128xf32>
    %cst_18 = arith.constant dense<0.000000e+00> : vector<2x128xf32>
    %19 = tpu.matmul %5, %18, %cst_18 {dimension_numbers = #tpu.dot_dimension_numbers<[1], [0], [0], [1], [0, 0, 1, 1], [], []>} : vector<2x128xf32>, vector<128x128xf32>, vector<2x128xf32> -> vector<2x128xf32>
    %c0_19 = arith.constant 0 : index
    %c0_20 = arith.constant 0 : index
    %20 = vector.load %arg8[%c0_19, %c0_20] : memref<128x128xf32, #tpu.memory_space<vmem>>, vector<128x128xf32>
    %cst_21 = arith.constant dense<0.000000e+00> : vector<2x128xf32>
    %21 = tpu.matmul %11, %20, %cst_21 {dimension_numbers = #tpu.dot_dimension_numbers<[1], [0], [0], [1], [0, 0, 1, 1], [], []>} : vector<2x128xf32>, vector<128x128xf32>, vector<2x128xf32> -> vector<2x128xf32>
    %22 = arith.addf %19, %21 : vector<2x128xf32>
    %c0_22 = arith.constant 0 : index
    %c0_23 = arith.constant 0 : index
    %23 = vector.load %arg9[%c0_22, %c0_23] : memref<128x128xf32, #tpu.memory_space<vmem>>, vector<128x128xf32>
    %cst_24 = arith.constant dense<0.000000e+00> : vector<2x128xf32>
    %24 = tpu.matmul %17, %23, %cst_24 {dimension_numbers = #tpu.dot_dimension_numbers<[1], [0], [0], [1], [0, 0, 1, 1], [], []>} : vector<2x128xf32>, vector<128x128xf32>, vector<2x128xf32> -> vector<2x128xf32>
    %25 = arith.addf %22, %24 : vector<2x128xf32>
    %c0_25 = arith.constant 0 : index
    %c0_26 = arith.constant 0 : index
    %26 = vector.load %arg10[%c0_25, %c0_26] : memref<1x128xf32, #tpu.memory_space<vmem>>, vector<1x128xf32>
    %27 = vector.broadcast %26 : vector<1x128xf32> to vector<2x128xf32>
    %28 = arith.addf %25, %27 : vector<2x128xf32>
    %cst_27 = arith.constant 0.000000e+00 : f32
    %29 = vector.broadcast %cst_27 : f32 to vector<2x128xf32>
    %30 = arith.maximumf %28, %29 : vector<2x128xf32>
    %c0_28 = arith.constant 0 : index
    %c0_29 = arith.constant 0 : index
    %31 = vector.load %arg11[%c0_28, %c0_29] : memref<128x128xf32, #tpu.memory_space<vmem>>, vector<128x128xf32>
    %cst_30 = arith.constant dense<0.000000e+00> : vector<2x128xf32>
    %32 = tpu.matmul %30, %31, %cst_30 {dimension_numbers = #tpu.dot_dimension_numbers<[1], [0], [0], [1], [0, 0, 1, 1], [], []>} : vector<2x128xf32>, vector<128x128xf32>, vector<2x128xf32> -> vector<2x128xf32>
    %c0_31 = arith.constant 0 : index
    %c0_32 = arith.constant 0 : index
    %33 = vector.load %arg12[%c0_31, %c0_32] : memref<1x128xf32, #tpu.memory_space<vmem>>, vector<1x128xf32>
    %34 = vector.broadcast %33 : vector<1x128xf32> to vector<2x128xf32>
    %35 = arith.addf %32, %34 : vector<2x128xf32>
    %cst_33 = arith.constant 0.000000e+00 : f32
    %36 = vector.broadcast %cst_33 : f32 to vector<2x128xf32>
    %37 = arith.maximumf %35, %36 : vector<2x128xf32>
    %c0_34 = arith.constant 0 : index
    %c0_35 = arith.constant 0 : index
    %38 = vector.load %arg13[%c0_34, %c0_35] : memref<128x128xf32, #tpu.memory_space<vmem>>, vector<128x128xf32>
    %cst_36 = arith.constant dense<0.000000e+00> : vector<2x128xf32>
    %39 = tpu.matmul %37, %38, %cst_36 {dimension_numbers = #tpu.dot_dimension_numbers<[1], [0], [0], [1], [0, 0, 1, 1], [], []>} : vector<2x128xf32>, vector<128x128xf32>, vector<2x128xf32> -> vector<2x128xf32>
    %c0_37 = arith.constant 0 : index
    %c0_38 = arith.constant 0 : index
    %40 = vector.load %arg14[%c0_37, %c0_38] : memref<1x128xf32, #tpu.memory_space<vmem>>, vector<1x128xf32>
    %41 = vector.broadcast %40 : vector<1x128xf32> to vector<2x128xf32>
    %42 = arith.addf %39, %41 : vector<2x128xf32>
    %43 = arith.mulf %42, %42 : vector<2x128xf32>
    %cst_39 = arith.constant dense<0.000000e+00> : vector<2xf32>
    %44 = vector.multi_reduction <add>, %43, %cst_39 [1] : vector<2x128xf32> to vector<2xf32>
    %45 = vector.shape_cast %44 : vector<2xf32> to vector<2x1xf32>
    %cst_40 = arith.constant 1.000000e-24 : f32
    %46 = vector.broadcast %cst_40 : f32 to vector<2x1xf32>
    %47 = arith.maximumf %45, %46 : vector<2x1xf32>
    %48 = math.rsqrt %47 : vector<2x1xf32>
    %49 = vector.broadcast %48 : vector<2x1xf32> to vector<2x128xf32>
    %50 = arith.mulf %42, %49 : vector<2x128xf32>
    %c0_41 = arith.constant 0 : index
    %c0_42 = arith.constant 0 : index
    %51 = vector.load %arg15[%c0_41, %c0_42] : memref<2x128xf32, #tpu.memory_space<vmem>>, vector<2x128xf32>
    tpu.vector_store %arg15[%c0_41, %c0_42], %50 {strides = array<i32>} : memref<2x128xf32, #tpu.memory_space<vmem>>, vector<2x128xf32>,
    return
  }
  func.func @transform_0(%arg0: i32) -> (i32, i32) {
    %c0_i32 = arith.constant 0 : i32
    %c0_i32_0 = arith.constant 0 : i32
    return %arg0, %c0_i32 : i32, i32
  }
  func.func @transform_1(%arg0: i32) -> (i32, i32) {
    %c0_i32 = arith.constant 0 : i32
    %c0_i32_0 = arith.constant 0 : i32
    return %arg0, %c0_i32 : i32, i32
  }
  func.func @transform_2(%arg0: i32) -> (i32, i32) {
    %c0_i32 = arith.constant 0 : i32
    %c0_i32_0 = arith.constant 0 : i32
    return %arg0, %c0_i32 : i32, i32
  }
  func.func @transform_3(%arg0: i32) -> (i32, i32) {
    %c0_i32 = arith.constant 0 : i32
    %c0_i32_0 = arith.constant 0 : i32
    %c0_i32_1 = arith.constant 0 : i32
    return %c0_i32, %c0_i32_0 : i32, i32
  }
  func.func @transform_4(%arg0: i32) -> (i32, i32) {
    %c0_i32 = arith.constant 0 : i32
    %c0_i32_0 = arith.constant 0 : i32
    %c0_i32_1 = arith.constant 0 : i32
    return %c0_i32, %c0_i32_0 : i32, i32
  }
  func.func @transform_5(%arg0: i32) -> (i32, i32) {
    %c0_i32 = arith.constant 0 : i32
    %c0_i32_0 = arith.constant 0 : i32
    %c0_i32_1 = arith.constant 0 : i32
    return %c0_i32, %c0_i32_0 : i32, i32
  }
  func.func @transform_6(%arg0: i32) -> (i32, i32) {
    %c0_i32 = arith.constant 0 : i32
    %c0_i32_0 = arith.constant 0 : i32
    %c0_i32_1 = arith.constant 0 : i32
    return %c0_i32, %c0_i32_0 : i32, i32
  }
  func.func @transform_7(%arg0: i32) -> (i32, i32) {
    %c0_i32 = arith.constant 0 : i32
    %c0_i32_0 = arith.constant 0 : i32
    %c0_i32_1 = arith.constant 0 : i32
    return %c0_i32, %c0_i32_0 : i32, i32
  }
  func.func @transform_8(%arg0: i32) -> (i32, i32) {
    %c0_i32 = arith.constant 0 : i32
    %c0_i32_0 = arith.constant 0 : i32
    %c0_i32_1 = arith.constant 0 : i32
    return %c0_i32, %c0_i32_0 : i32, i32
  }
  func.func @transform_9(%arg0: i32) -> (i32, i32) {
    %c0_i32 = arith.constant 0 : i32
    %c0_i32_0 = arith.constant 0 : i32
    %c0_i32_1 = arith.constant 0 : i32
    return %c0_i32, %c0_i32_0 : i32, i32
  }
  func.func @transform_10(%arg0: i32) -> (i32, i32) {
    %c0_i32 = arith.constant 0 : i32
    %c0_i32_0 = arith.constant 0 : i32
    %c0_i32_1 = arith.constant 0 : i32
    return %c0_i32, %c0_i32_0 : i32, i32
  }
  func.func @transform_11(%arg0: i32) -> (i32, i32) {
    %c0_i32 = arith.constant 0 : i32
    %c0_i32_0 = arith.constant 0 : i32
    %c0_i32_1 = arith.constant 0 : i32
    return %c0_i32, %c0_i32_0 : i32, i32
  }
  func.func @transform_12(%arg0: i32) -> (i32, i32) {
    %c0_i32 = arith.constant 0 : i32
    %c0_i32_0 = arith.constant 0 : i32
    %c0_i32_1 = arith.constant 0 : i32
    return %c0_i32, %c0_i32_0 : i32, i32
  }
  func.func @transform_13(%arg0: i32) -> (i32, i32) {
    %c0_i32 = arith.constant 0 : i32
    %c0_i32_0 = arith.constant 0 : i32
    %c0_i32_1 = arith.constant 0 : i32
    return %c0_i32, %c0_i32_0 : i32, i32
  }
  func.func @transform_14(%arg0: i32) -> (i32, i32) {
    %c0_i32 = arith.constant 0 : i32
    %c0_i32_0 = arith.constant 0 : i32
    return %arg0, %c0_i32 : i32, i32
  }
}

</mosaic_0001>

<llo_original>
// kernel: tpu_custom_call.1
$region0: #{tpu_custom_call.1}
  #allocation0 [shape = 'u32[]', space=smem, size = 0x4, offset = 0x4, fixed_abs, tag = 'smem constant byte address 0x4 - core index']
  #allocation1 [shape = 'u32[144,128]{1,0:T(1,128)}', space=vmem, size = 0x12000, scoped, tag = 'internal scratch']
  %s0 = inlined_call_operand.hbm [shape: f32[2,1206], index: 0, kind: input, shape index: {}]
  %s1 = inlined_call_operand.hbm [shape: f32[2,900], index: 1, kind: input, shape index: {}]
  %s2 = inlined_call_operand.hbm [shape: f32[2,500], index: 2, kind: input, shape index: {}]
  %s3 = inlined_call_operand.hbm [shape: bf16[1206,128], index: 3, kind: input, shape index: {}]
  %s4 = inlined_call_operand.hbm [shape: bf16[900,128], index: 4, kind: input, shape index: {}]
  %s5 = inlined_call_operand.hbm [shape: bf16[500,128], index: 5, kind: input, shape index: {}]
  %s6 = inlined_call_operand.hbm [shape: f32[128,128], index: 6, kind: input, shape index: {}]
  %s7 = inlined_call_operand.hbm [shape: f32[128,128], index: 7, kind: input, shape index: {}]
  %s8 = inlined_call_operand.hbm [shape: f32[128,128], index: 8, kind: input, shape index: {}]
  %s9 = inlined_call_operand.vmem [shape: f32[1,128], index: 9, kind: input, shape index: {}]
  %s10 = inlined_call_operand.hbm [shape: f32[128,128], index: 10, kind: input, shape index: {}]
  %s11 = inlined_call_operand.vmem [shape: f32[1,128], index: 11, kind: input, shape index: {}]
  %s12 = inlined_call_operand.hbm [shape: f32[128,128], index: 12, kind: input, shape index: {}]
  %s13 = inlined_call_operand.vmem [shape: f32[1,128], index: 13, kind: input, shape index: {}]
  %s14 = inlined_call_operand.hbm [shape: f32[2,128], index: 14, kind: output, shape index: {}]
  %s15 = sld [smem:[#allocation0]]
  $region110: #{tpu_custom_call.1} parent=0
    _
  %s17 = ssub.s32 1, %s15
  %s18 = scalar_select 0, %s17, %s15
  $region1: #{tpu_custom_call.1} parent=0
    #allocation2 [shape = 'u8[10240]{0}', space=vmem, size = 0x2800, scoped, tag = 'input window, operand 0, single buffered']
    #allocation3 [shape = 's32[1]{0}', space=sflag, size = 0x4, scoped, tag = 'scoped memory for tpu_custom_call.1']
    #allocation4 [shape = 's32[1]{0}', space=sflag, size = 0x4, scoped, tag = 'scoped memory for tpu_custom_call.1']
    #allocation5 [shape = 'u8[8192]{0}', space=vmem, size = 0x2000, scoped, tag = 'input window, operand 1, single buffered']
    #allocation6 [shape = 's32[1]{0}', space=sflag, size = 0x4, scoped, tag = 'scoped memory for tpu_custom_call.1']
    #allocation7 [shape = 'u8[4096]{0}', space=vmem, size = 0x1000, scoped, tag = 'input window, operand 2, single buffered']
    #allocation8 [shape = 'u8[309248]{0}', space=vmem, size = 0x4b800, scoped, tag = 'input window, operand 3, single buffered']
    #allocation9 [shape = 's32[1]{0}', space=sflag, size = 0x4, scoped, tag = 'scoped memory for tpu_custom_call.1']
    #allocation10 [shape = 'u8[231424]{0}', space=vmem, size = 0x38800, scoped, tag = 'input window, operand 4, single buffered']
    #allocation11 [shape = 'u8[129024]{0}', space=vmem, size = 0x1f800, scoped, tag = 'input window, operand 5, single buffered']
    #allocation12 [shape = 's32[1]{0}', space=sflag, size = 0x4, scoped, tag = 'scoped memory for tpu_custom_call.1']
    #allocation13 [shape = 'u8[65536]{0}', space=vmem, size = 0x10000, scoped, tag = 'input window, operand 6, single buffered']
    #allocation14 [shape = 'u8[65536]{0}', space=vmem, size = 0x10000, scoped, tag = 'input window, operand 7, single buffered']
    #allocation15 [shape = 's32[1]{0}', space=sflag, size = 0x4, scoped, tag = 'scoped memory for tpu_custom_call.1']
    #allocation16 [shape = 'u8[65536]{0}', space=vmem, size = 0x10000, scoped, tag = 'input window, operand 8, single buffered']
    #allocation17 [shape = 'u8[65536]{0}', space=vmem, size = 0x10000, scoped, tag = 'input window, operand 10, single buffered']
    #allocation18 [shape = 's32[1]{0}', space=sflag, size = 0x4, scoped, tag = 'scoped memory for tpu_custom_call.1']
    #allocation19 [shape = 'u8[65536]{0}', space=vmem, size = 0x10000, scoped, tag = 'input window, operand 12, single buffered']
    #allocation20 [shape = 'u8[1024]{0}', space=vmem, size = 0x400, scoped, tag = 'output window, operand 0, single buffered']
    %19 = vsyncpa [#allocation3], 0
    %20 = vsyncpa [#allocation6], 0
    %21 = vsyncpa [#allocation9], 0
    %22 = vsyncpa [#allocation12], 0
    %23 = vsyncpa [#allocation15], 0
    %24 = vsyncpa [#allocation18], 0
    %25 = vsyncpa [#allocation4], 0
    // Predicated region
    $region2: #{tpu_custom_call.1} parent=1 // pred_check
      _
    $region3: #{tpu_custom_call.1} parent=1 // pred_check_branch
      %27 = sbr.rel (0) target = $region5
    $region4: #{tpu_custom_call.1} parent=1 // pred_region
      %s29 = ssub.s32 320, 320
      %30 = vsyncadd [#allocation3], %s29
      %s32 = sshll.u32 [#allocation2], 4
      %s33 = int_to_ptr.vmem [resolvable:$true] %s32
      %35 = dma.hbm_to_vmem [thread:$0]  %s0, 320, %s33, [#allocation3]
    $region5: #{tpu_custom_call.1} parent=1 // pred_fallthru
      _
    // Predicated region
    $region6: #{tpu_custom_call.1} parent=1 // pred_check
      _
    $region7: #{tpu_custom_call.1} parent=1 // pred_check_branch
      %37 = sbr.rel (0) target = $region9
    $region8: #{tpu_custom_call.1} parent=1 // pred_region
      %s39 = ssub.s32 256, 256
      %40 = vsyncadd [#allocation6], %s39
      %s42 = sshll.u32 [#allocation5], 4
      %s43 = int_to_ptr.vmem [resolvable:$true] %s42
      %45 = dma.hbm_to_vmem [thread:$0]  %s1, 256, %s43, [#allocation6]
    $region9: #{tpu_custom_call.1} parent=1 // pred_fallthru
      _
    // Predicated region
    $region10: #{tpu_custom_call.1} parent=1 // pred_check
      _
    $region11: #{tpu_custom_call.1} parent=1 // pred_check_branch
      %47 = sbr.rel (0) target = $region13
    $region12: #{tpu_custom_call.1} parent=1 // pred_region
      %s49 = ssub.s32 128, 128
      %50 = vsyncadd [#allocation6], %s49
      %s52 = sshll.u32 [#allocation7], 4
      %s53 = int_to_ptr.vmem [resolvable:$true] %s52
      %55 = dma.hbm_to_vmem [thread:$0]  %s2, 128, %s53, [#allocation6]
    $region13: #{tpu_custom_call.1} parent=1 // pred_fallthru
      _
    // Predicated region
    $region14: #{tpu_custom_call.1} parent=1 // pred_check
      _
    $region15: #{tpu_custom_call.1} parent=1 // pred_check_branch
      %57 = sbr.rel (0) target = $region17
    $region16: #{tpu_custom_call.1} parent=1 // pred_region
      %s59 = ssub.s32 9664, 9664
      %60 = vsyncadd [#allocation9], %s59
      %s61 = sshll.u32 [#allocation8], 4
      %s62 = int_to_ptr.vmem [resolvable:$true] %s61
      %67 = dma.hbm_to_vmem [thread:$0]  %s3, 9664, %s62, [#allocation9], 64, 64, 4
    $region17: #{tpu_custom_call.1} parent=1 // pred_fallthru
      _
    // Predicated region
    $region18: #{tpu_custom_call.1} parent=1 // pred_check
      _
    $region19: #{tpu_custom_call.1} parent=1 // pred_check_branch
      %69 = sbr.rel (0) target = $region21
    $region20: #{tpu_custom_call.1} parent=1 // pred_region
      %s71 = ssub.s32 7232, 7232
      %72 = vsyncadd [#allocation9], %s71
      %s73 = sshll.u32 [#allocation10], 4
      %s74 = int_to_ptr.vmem [resolvable:$true] %s73
      %79 = dma.hbm_to_vmem [thread:$0]  %s4, 7232, %s74, [#allocation9], 64, 64, 4
    $region21: #{tpu_custom_call.1} parent=1 // pred_fallthru
      _
    // Predicated region
    $region22: #{tpu_custom_call.1} parent=1 // pred_check
      _
    $region23: #{tpu_custom_call.1} parent=1 // pred_check_branch
      %81 = sbr.rel (0) target = $region25
    $region24: #{tpu_custom_call.1} parent=1 // pred_region
      %s83 = ssub.s32 4032, 4032
      %84 = vsyncadd [#allocation12], %s83
      %s85 = sshll.u32 [#allocation11], 4
      %s86 = int_to_ptr.vmem [resolvable:$true] %s85
      %91 = dma.hbm_to_vmem [thread:$0]  %s5, 4032, %s86, [#allocation12], 64, 64, 4
    $region25: #{tpu_custom_call.1} parent=1 // pred_fallthru
      _
    // Predicated region
    $region26: #{tpu_custom_call.1} parent=1 // pred_check
      _
    $region27: #{tpu_custom_call.1} parent=1 // pred_check_branch
      %93 = sbr.rel (0) target = $region29
    $region28: #{tpu_custom_call.1} parent=1 // pred_region
      %s95 = ssub.s32 2048, 2048
      %96 = vsyncadd [#allocation12], %s95
      %s97 = sshll.u32 [#allocation13], 4
      %s98 = int_to_ptr.vmem [resolvable:$true] %s97
      %103 = dma.hbm_to_vmem [thread:$0]  %s6, 2048, %s98, [#allocation12], 128, 128, 8
    $region29: #{tpu_custom_call.1} parent=1 // pred_fallthru
      _
    // Predicated region
    $region30: #{tpu_custom_call.1} parent=1 // pred_check
      _
    $region31: #{tpu_custom_call.1} parent=1 // pred_check_branch
      %105 = sbr.rel (0) target = $region33
    $region32: #{tpu_custom_call.1} parent=1 // pred_region
      %s107 = ssub.s32 2048, 2048
      %108 = vsyncadd [#allocation15], %s107
      %s109 = sshll.u32 [#allocation14], 4
      %s110 = int_to_ptr.vmem [resolvable:$true] %s109
      %115 = dma.hbm_to_vmem [thread:$0]  %s7, 2048, %s110, [#allocation15], 128, 128, 8
    $region33: #{tpu_custom_call.1} parent=1 // pred_fallthru
      _
    // Predicated region
    $region34: #{tpu_custom_call.1} parent=1 // pred_check
      _
    $region35: #{tpu_custom_call.1} parent=1 // pred_check_branch
      %117 = sbr.rel (0) target = $region37
    $region36: #{tpu_custom_call.1} parent=1 // pred_region
      %s119 = ssub.s32 2048, 2048
      %120 = vsyncadd [#allocation15], %s119
      %s121 = sshll.u32 [#allocation16], 4
      %s122 = int_to_ptr.vmem [resolvable:$true] %s121
      %127 = dma.hbm_to_vmem [thread:$0]  %s8, 2048, %s122, [#allocation15], 128, 128, 8
    $region37: #{tpu_custom_call.1} parent=1 // pred_fallthru
      _
    // Predicated region
    $region38: #{tpu_custom_call.1} parent=1 // pred_check
      _
    $region39: #{tpu_custom_call.1} parent=1 // pred_check_branch
      %129 = sbr.rel (0) target = $region41
    $region40: #{tpu_custom_call.1} parent=1 // pred_region
      _
    $region41: #{tpu_custom_call.1} parent=1 // pred_fallthru
      _
    // Predicated region
    $region42: #{tpu_custom_call.1} parent=1 // pred_check
      _
    $region43: #{tpu_custom_call.1} parent=1 // pred_check_branch
      %131 = sbr.rel (0) target = $region45
    $region44: #{tpu_custom_call.1} parent=1 // pred_region
      %s133 = ssub.s32 2048, 2048
      %134 = vsyncadd [#allocation18], %s133
      %s135 = sshll.u32 [#allocation17], 4
      %s136 = int_to_ptr.vmem [resolvable:$true] %s135
      %141 = dma.hbm_to_vmem [thread:$0]  %s10, 2048, %s136, [#allocation18], 128, 128, 8
    $region45: #{tpu_custom_call.1} parent=1 // pred_fallthru
      _
    // Predicated region
    $region46: #{tpu_custom_call.1} parent=1 // pred_check
      _
    $region47: #{tpu_custom_call.1} parent=1 // pred_check_branch
      %143 = sbr.rel (0) target = $region49
    $region48: #{tpu_custom_call.1} parent=1 // pred_region
      _
    $region49: #{tpu_custom_call.1} parent=1 // pred_fallthru
      _
    // Predicated region
    $region50: #{tpu_custom_call.1} parent=1 // pred_check
      _
    $region51: #{tpu_custom_call.1} parent=1 // pred_check_branch
      %145 = sbr.rel (0) target = $region53
    $region52: #{tpu_custom_call.1} parent=1 // pred_region
      %s147 = ssub.s32 2048, 2048
      %148 = vsyncadd [#allocation18], %s147
      %s149 = sshll.u32 [#allocation19], 4
      %s150 = int_to_ptr.vmem [resolvable:$true] %s149
      %155 = dma.hbm_to_vmem [thread:$0]  %s12, 2048, %s150, [#allocation18], 128, 128, 8
    $region53: #{tpu_custom_call.1} parent=1 // pred_fallthru
      _
    // Predicated region
    $region54: #{tpu_custom_call.1} parent=1 // pred_check
      _
    $region55: #{tpu_custom_call.1} parent=1 // pred_check_branch
      %157 = sbr.rel (0) target = $region57
    $region56: #{tpu_custom_call.1} parent=1 // pred_region
      _
    $region57: #{tpu_custom_call.1} parent=1 // pred_fallthru
      _
    // Predicated region
    $region58: #{tpu_custom_call.1} parent=1 // pred_check
      _
    $region59: #{tpu_custom_call.1} parent=1 // pred_check_branch
      %159 = sbr.rel (0) target = $region61
    $region60: #{tpu_custom_call.1} parent=1 // pred_region
      %160 = dma.done [#allocation3], 320
    $region61: #{tpu_custom_call.1} parent=1 // pred_fallthru
      _
    // Predicated region
    $region62: #{tpu_custom_call.1} parent=1 // pred_check
      _
    $region63: #{tpu_custom_call.1} parent=1 // pred_check_branch
      %162 = sbr.rel (0) target = $region65
    $region64: #{tpu_custom_call.1} parent=1 // pred_region
      %163 = dma.done [#allocation6], 256
    $region65: #{tpu_custom_call.1} parent=1 // pred_fallthru
      _
    // Predicated region
    $region66: #{tpu_custom_call.1} parent=1 // pred_check
      _
    $region67: #{tpu_custom_call.1} parent=1 // pred_check_branch
      %165 = sbr.rel (0) target = $region69
    $region68: #{tpu_custom_call.1} parent=1 // pred_region
      %166 = dma.done [#allocation6], 128
    $region69: #{tpu_custom_call.1} parent=1 // pred_fallthru
      _
    // Predicated region
    $region70: #{tpu_custom_call.1} parent=1 // pred_check
      _
    $region71: #{tpu_custom_call.1} parent=1 // pred_check_branch
      %168 = sbr.rel (0) target = $region73
    $region72: #{tpu_custom_call.1} parent=1 // pred_region
      %169 = dma.done [#allocation9], 9664
    $region73: #{tpu_custom_call.1} parent=1 // pred_fallthru
      _
    // Predicated region
    $region74: #{tpu_custom_call.1} parent=1 // pred_check
      _
    $region75: #{tpu_custom_call.1} parent=1 // pred_check_branch
      %171 = sbr.rel (0) target = $region77
    $region76: #{tpu_custom_call.1} parent=1 // pred_region
      %172 = dma.done [#allocation9], 7232
    $region77: #{tpu_custom_call.1} parent=1 // pred_fallthru
      _
    // Predicated region
    $region78: #{tpu_custom_call.1} parent=1 // pred_check
      _
    $region79: #{tpu_custom_call.1} parent=1 // pred_check_branch
      %174 = sbr.rel (0) target = $region81
    $region80: #{tpu_custom_call.1} parent=1 // pred_region
      %175 = dma.done [#allocation12], 4032
    $region81: #{tpu_custom_call.1} parent=1 // pred_fallthru
      _
    // Predicated region
    $region82: #{tpu_custom_call.1} parent=1 // pred_check
      _
    $region83: #{tpu_custom_call.1} parent=1 // pred_check_branch
      %177 = sbr.rel (0) target = $region85
    $region84: #{tpu_custom_call.1} parent=1 // pred_region
      %178 = dma.done [#allocation12], 2048
    $region85: #{tpu_custom_call.1} parent=1 // pred_fallthru
      _
    // Predicated region
    $region86: #{tpu_custom_call.1} parent=1 // pred_check
      _
    $region87: #{tpu_custom_call.1} parent=1 // pred_check_branch
      %180 = sbr.rel (0) target = $region89
    $region88: #{tpu_custom_call.1} parent=1 // pred_region
      %181 = dma.done [#allocation15], 2048
    $region89: #{tpu_custom_call.1} parent=1 // pred_fallthru
      _
    // Predicated region
    $region90: #{tpu_custom_call.1} parent=1 // pred_check
      _
    $region91: #{tpu_custom_call.1} parent=1 // pred_check_branch
      %183 = sbr.rel (0) target = $region93
    $region92: #{tpu_custom_call.1} parent=1 // pred_region
      %184 = dma.done [#allocation15], 2048
    $region93: #{tpu_custom_call.1} parent=1 // pred_fallthru
      _
    // Predicated region
    $region94: #{tpu_custom_call.1} parent=1 // pred_check
      _
    $region95: #{tpu_custom_call.1} parent=1 // pred_check_branch
      %186 = sbr.rel (0) target = $region97
    $region96: #{tpu_custom_call.1} parent=1 // pred_region
      %187 = dma.done [#allocation18], 2048
    $region97: #{tpu_custom_call.1} parent=1 // pred_fallthru
      _
    // Predicated region
    $region98: #{tpu_custom_call.1} parent=1 // pred_check
      _
    $region99: #{tpu_custom_call.1} parent=1 // pred_check_branch
      %189 = sbr.rel (0) target = $region101
    $region100: #{tpu_custom_call.1} parent=1 // pred_region
      %190 = dma.done [#allocation18], 2048
    $region101: #{tpu_custom_call.1} parent=1 // pred_fallthru
      _
    %v192 = vld [vmem:[#allocation2] sm:$0xff]
    %v193 = vld [vmem:[#allocation2 + $0x8] sm:$0xff]
    %v194 = vld [vmem:[#allocation2 + $0x10] sm:$0xf]
    %v198 = vcombine.high %v192, %v192
    %v200 = vunpack.c.l.s4 1983009808
    %v201 = vunpack.c.0.s8 %v200
    %v202 = vlaneseq
    %v203 = vshrl.u32 %v202, 7
    %v204 = vsub.s32 %v201, %v203
    %v205 = vrot.slane %v192, %v204
    %v207 = vunpack.c.l.s4 1983009808
    %v208 = vunpack.c.0.s8 %v207
    %v209 = vlaneseq
    %v210 = vshrl.u32 %v209, 7
    %v211 = vsub.s32 %v208, %v210
    %v212 = vrot.slane %v198, %v211
    %v213 = vcombine.high %v205, %v205
    %v214 = vcombine.high %v212, %v212
    %v215 = vcombine.high %v193, %v193
    %v217 = vunpack.c.l.s4 1983009808
    %v218 = vunpack.c.0.s8 %v217
    %v219 = vlaneseq
    %v220 = vshrl.u32 %v219, 7
    %v221 = vsub.s32 %v218, %v220
    %v222 = vrot.slane %v193, %v221
    %v224 = vunpack.c.l.s4 1983009808
    %v225 = vunpack.c.0.s8 %v224
    %v226 = vlaneseq
    %v227 = vshrl.u32 %v226, 7
    %v228 = vsub.s32 %v225, %v227
    %v229 = vrot.slane %v215, %v228
    %v230 = vcombine.high %v222, %v222
    %v231 = vcombine.high %v229, %v229
    %v233 = vunpack.c.l.s4 1983009808
    %v234 = vunpack.c.0.s8 %v233
    %v235 = vlaneseq
    %v236 = vshrl.u32 %v235, 7
    %v237 = vsub.s32 %v234, %v236
    %v238 = vrot.slane %v194, %v237
    %v239 = vcombine.high %v238, %v238
    %v250 = vpack.c.bf16 %v205, %v205
    %v251 = vpack.c.bf16 %v213, %v213
    %v252 = vpack.c.bf16 %v212, %v212
    %v253 = vpack.c.bf16 %v214, %v214
    %v254 = vpack.c.bf16 %v222, %v222
    %v255 = vpack.c.bf16 %v230, %v230
    %v256 = vpack.c.bf16 %v229, %v229
    %v257 = vpack.c.bf16 %v231, %v231
    %v258 = vpack.c.bf16 %v238, %v238
    %v259 = vpack.c.bf16 %v239, %v239
    %v260 = vld [vmem:[#allocation8] sm:$0xf]
    %v261 = vld [vmem:[#allocation8 + $0x4] sm:$0xf]
    %v262 = vld [vmem:[#allocation8 + $0x8] sm:$0xf]
    %v263 = vld [vmem:[#allocation8 + $0xc] sm:$0xf]
    %v264 = vld [vmem:[#allocation8 + $0x10] sm:$0xf]
    %v265 = vld [vmem:[#allocation8 + $0x14] sm:$0xf]
    %v266 = vld [vmem:[#allocation8 + $0x18] sm:$0xf]
    %v267 = vld [vmem:[#allocation8 + $0x1c] sm:$0xf]
    %v268 = vld [vmem:[#allocation8 + $0x20] sm:$0xf]
    %v269 = vld [vmem:[#allocation8 + $0x24] sm:$0xf]
    %v270 = vld [vmem:[#allocation8 + $0x28] sm:$0xf]
    %v271 = vld [vmem:[#allocation8 + $0x2c] sm:$0xf]
    %v272 = vld [vmem:[#allocation8 + $0x30] sm:$0xf]
    %v273 = vld [vmem:[#allocation8 + $0x34] sm:$0xf]
    %v274 = vld [vmem:[#allocation8 + $0x38] sm:$0xf]
    %v275 = vld [vmem:[#allocation8 + $0x3c] sm:$0xf]
    %v276 = vld [vmem:[#allocation8 + $0x40] sm:$0xf]
    %v277 = vld [vmem:[#allocation8 + $0x44] sm:$0xf]
    %v278 = vld [vmem:[#allocation8 + $0x48] sm:$0xf]
    %v279 = vld [vmem:[#allocation8 + $0x4c] sm:$0xf]
    %v280 = vld [vmem:[#allocation8 + $0x50] sm:$0xf]
    %v281 = vld [vmem:[#allocation8 + $0x54] sm:$0xf]
    %v282 = vld [vmem:[#allocation8 + $0x58] sm:$0xf]
    %v283 = vld [vmem:[#allocation8 + $0x5c] sm:$0xf]
    %v284 = vld [vmem:[#allocation8 + $0x60] sm:$0xf]
    %v285 = vld [vmem:[#allocation8 + $0x64] sm:$0xf]
    %v286 = vld [vmem:[#allocation8 + $0x68] sm:$0xf]
    %v287 = vld [vmem:[#allocation8 + $0x6c] sm:$0xf]
    %v288 = vld [vmem:[#allocation8 + $0x70] sm:$0xf]
    %v289 = vld [vmem:[#allocation8 + $0x74] sm:$0xf]
    %v290 = vld [vmem:[#allocation8 + $0x78] sm:$0xf]
    %v291 = vld [vmem:[#allocation8 + $0x7c] sm:$0xf]
    %v292 = vld [vmem:[#allocation8 + $0x80] sm:$0xf]
    %v293 = vld [vmem:[#allocation8 + $0x84] sm:$0xf]
    %v294 = vld [vmem:[#allocation8 + $0x88] sm:$0xf]
    %v295 = vld [vmem:[#allocation8 + $0x8c] sm:$0xf]
    %v296 = vld [vmem:[#allocation8 + $0x90] sm:$0xf]
    %v297 = vld [vmem:[#allocation8 + $0x94] sm:$0xf]
    %v298 = vld [vmem:[#allocation8 + $0x98] sm:$0xf]
    %v299 = vld [vmem:[#allocation8 + $0x9c] sm:$0xf]
    %v300 = vld [vmem:[#allocation8 + $0xa0] sm:$0xf]
    %v301 = vld [vmem:[#allocation8 + $0xa4] sm:$0xf]
    %v302 = vld [vmem:[#allocation8 + $0xa8] sm:$0xf]
    %v303 = vld [vmem:[#allocation8 + $0xac] sm:$0xf]
    %v304 = vld [vmem:[#allocation8 + $0xb0] sm:$0xf]
    %v305 = vld [vmem:[#allocation8 + $0xb4] sm:$0xf]
    %v306 = vld [vmem:[#allocation8 + $0xb8] sm:$0xf]
    %v307 = vld [vmem:[#allocation8 + $0xbc] sm:$0xf]
    %v308 = vld [vmem:[#allocation8 + $0xc0] sm:$0xf]
    %v309 = vld [vmem:[#allocation8 + $0xc4] sm:$0xf]
    %v310 = vld [vmem:[#allocation8 + $0xc8] sm:$0xf]
    %v311 = vld [vmem:[#allocation8 + $0xcc] sm:$0xf]
    %v312 = vld [vmem:[#allocation8 + $0xd0] sm:$0xf]
    %v313 = vld [vmem:[#allocation8 + $0xd4] sm:$0xf]
    %v314 = vld [vmem:[#allocation8 + $0xd8] sm:$0xf]
    %v315 = vld [vmem:[#allocation8 + $0xdc] sm:$0xf]
    %v316 = vld [vmem:[#allocation8 + $0xe0] sm:$0xf]
    %v317 = vld [vmem:[#allocation8 + $0xe4] sm:$0xf]
    %v318 = vld [vmem:[#allocation8 + $0xe8] sm:$0xf]
    %v319 = vld [vmem:[#allocation8 + $0xec] sm:$0xf]
    %v320 = vld [vmem:[#allocation8 + $0xf0] sm:$0xf]
    %v321 = vld [vmem:[#allocation8 + $0xf4] sm:$0xf]
    %v322 = vld [vmem:[#allocation8 + $0xf8] sm:$0xf]
    %v323 = vld [vmem:[#allocation8 + $0xfc] sm:$0xf]
    %v324 = vld [vmem:[#allocation8 + $0x100] sm:$0xf]
    %v325 = vld [vmem:[#allocation8 + $0x104] sm:$0xf]
    %v326 = vld [vmem:[#allocation8 + $0x108] sm:$0xf]
    %v327 = vld [vmem:[#allocation8 + $0x10c] sm:$0xf]
    %v328 = vld [vmem:[#allocation8 + $0x110] sm:$0xf]
    %v329 = vld [vmem:[#allocation8 + $0x114] sm:$0xf]
    %v330 = vld [vmem:[#allocation8 + $0x118] sm:$0xf]
    %v331 = vld [vmem:[#allocation8 + $0x11c] sm:$0xf]
    %v332 = vld [vmem:[#allocation8 + $0x120] sm:$0xf]
    %v333 = vld [vmem:[#allocation8 + $0x124] sm:$0xf]
    %v334 = vld [vmem:[#allocation8 + $0x128] sm:$0xf]
    %v335 = vld [vmem:[#allocation8 + $0x12c] sm:$0xf]
    %v336 = vld [vmem:[#allocation8 + $0x130] sm:$0xf]
    %v337 = vld [vmem:[#allocation8 + $0x134] sm:$0xf]
    %v338 = vld [vmem:[#allocation8 + $0x138] sm:$0xf]
    %v339 = vld [vmem:[#allocation8 + $0x13c] sm:$0xf]
    %v340 = vld [vmem:[#allocation8 + $0x140] sm:$0xf]
    %v341 = vld [vmem:[#allocation8 + $0x144] sm:$0xf]
    %v342 = vld [vmem:[#allocation8 + $0x148] sm:$0xf]
    %v343 = vld [vmem:[#allocation8 + $0x14c] sm:$0xf]
    %v344 = vld [vmem:[#allocation8 + $0x150] sm:$0xf]
    %v345 = vld [vmem:[#allocation8 + $0x154] sm:$0xf]
    %v346 = vld [vmem:[#allocation8 + $0x158] sm:$0xf]
    %v347 = vld [vmem:[#allocation8 + $0x15c] sm:$0xf]
    %v348 = vld [vmem:[#allocation8 + $0x160] sm:$0xf]
    %v349 = vld [vmem:[#allocation8 + $0x164] sm:$0xf]
    %v350 = vld [vmem:[#allocation8 + $0x168] sm:$0xf]
    %v351 = vld [vmem:[#allocation8 + $0x16c] sm:$0xf]
    %v352 = vld [vmem:[#allocation8 + $0x170] sm:$0xf]
    %v353 = vld [vmem:[#allocation8 + $0x174] sm:$0xf]
    %v354 = vld [vmem:[#allocation8 + $0x178] sm:$0xf]
    %v355 = vld [vmem:[#allocation8 + $0x17c] sm:$0xf]
    %v356 = vld [vmem:[#allocation8 + $0x180] sm:$0xf]
    %v357 = vld [vmem:[#allocation8 + $0x184] sm:$0xf]
    %v358 = vld [vmem:[#allocation8 + $0x188] sm:$0xf]
    %v359 = vld [vmem:[#allocation8 + $0x18c] sm:$0xf]
    %v360 = vld [vmem:[#allocation8 + $0x190] sm:$0xf]
    %v361 = vld [vmem:[#allocation8 + $0x194] sm:$0xf]
    %v362 = vld [vmem:[#allocation8 + $0x198] sm:$0xf]
    %v363 = vld [vmem:[#allocation8 + $0x19c] sm:$0xf]
    %v364 = vld [vmem:[#allocation8 + $0x1a0] sm:$0xf]
    %v365 = vld [vmem:[#allocation8 + $0x1a4] sm:$0xf]
    %v366 = vld [vmem:[#allocation8 + $0x1a8] sm:$0xf]
    %v367 = vld [vmem:[#allocation8 + $0x1ac] sm:$0xf]
    %v368 = vld [vmem:[#allocation8 + $0x1b0] sm:$0xf]
    %v369 = vld [vmem:[#allocation8 + $0x1b4] sm:$0xf]
    %v370 = vld [vmem:[#allocation8 + $0x1b8] sm:$0xf]
    %v371 = vld [vmem:[#allocation8 + $0x1bc] sm:$0xf]
    %v372 = vld [vmem:[#allocation8 + $0x1c0] sm:$0xf]
    %v373 = vld [vmem:[#allocation8 + $0x1c4] sm:$0xf]
    %v374 = vld [vmem:[#allocation8 + $0x1c8] sm:$0xf]
    %v375 = vld [vmem:[#allocation8 + $0x1cc] sm:$0xf]
    %v376 = vld [vmem:[#allocation8 + $0x1d0] sm:$0xf]
    %v377 = vld [vmem:[#allocation8 + $0x1d4] sm:$0xf]
    %v378 = vld [vmem:[#allocation8 + $0x1d8] sm:$0xf]
    %v379 = vld [vmem:[#allocation8 + $0x1dc] sm:$0xf]
    %v380 = vld [vmem:[#allocation8 + $0x1e0] sm:$0xf]
    %v381 = vld [vmem:[#allocation8 + $0x1e4] sm:$0xf]
    %v382 = vld [vmem:[#allocation8 + $0x1e8] sm:$0xf]
    %v383 = vld [vmem:[#allocation8 + $0x1ec] sm:$0xf]
    %v384 = vld [vmem:[#allocation8 + $0x1f0] sm:$0xf]
    %v385 = vld [vmem:[#allocation8 + $0x1f4] sm:$0xf]
    %v386 = vld [vmem:[#allocation8 + $0x1f8] sm:$0xf]
    %v387 = vld [vmem:[#allocation8 + $0x1fc] sm:$0xf]
    %v388 = vld [vmem:[#allocation8 + $0x200] sm:$0xf]
    %v389 = vld [vmem:[#allocation8 + $0x204] sm:$0xf]
    %v390 = vld [vmem:[#allocation8 + $0x208] sm:$0xf]
    %v391 = vld [vmem:[#allocation8 + $0x20c] sm:$0xf]
    %v392 = vld [vmem:[#allocation8 + $0x210] sm:$0xf]
    %v393 = vld [vmem:[#allocation8 + $0x214] sm:$0xf]
    %v394 = vld [vmem:[#allocation8 + $0x218] sm:$0xf]
    %v395 = vld [vmem:[#allocation8 + $0x21c] sm:$0xf]
    %v396 = vld [vmem:[#allocation8 + $0x220] sm:$0xf]
    %v397 = vld [vmem:[#allocation8 + $0x224] sm:$0xf]
    %v398 = vld [vmem:[#allocation8 + $0x228] sm:$0xf]
    %v399 = vld [vmem:[#allocation8 + $0x22c] sm:$0xf]
    %v400 = vld [vmem:[#allocation8 + $0x230] sm:$0xf]
    %v401 = vld [vmem:[#allocation8 + $0x234] sm:$0xf]
    %v402 = vld [vmem:[#allocation8 + $0x238] sm:$0xf]
    %v403 = vld [vmem:[#allocation8 + $0x23c] sm:$0xf]
    %v404 = vld [vmem:[#allocation8 + $0x240] sm:$0xf]
    %v405 = vld [vmem:[#allocation8 + $0x244] sm:$0xf]
    %v406 = vld [vmem:[#allocation8 + $0x248] sm:$0xf]
    %v407 = vld [vmem:[#allocation8 + $0x24c] sm:$0xf]
    %v408 = vld [vmem:[#allocation8 + $0x250] sm:$0xf]
    %v409 = vld [vmem:[#allocation8 + $0x254] sm:$0xf]
    %v410 = vld [vmem:[#allocation8 + $0x258] sm:$0x7]
    %v562 = vunpack.c.l.b16 %v260
    %v563 = vunpack.c.l.b16 %v261
    %v564 = vunpack.c.l.b16 %v262
    %v565 = vunpack.c.l.b16 %v263
    %v566 = vunpack.c.l.b16 %v264
    %v567 = vunpack.c.l.b16 %v265
    %v568 = vunpack.c.l.b16 %v266
    %v569 = vunpack.c.l.b16 %v267
    %v570 = vunpack.c.l.b16 %v268
    %v571 = vunpack.c.l.b16 %v269
    %v572 = vunpack.c.l.b16 %v270
    %v573 = vunpack.c.l.b16 %v271
    %v574 = vunpack.c.l.b16 %v272
    %v575 = vunpack.c.l.b16 %v273
    %v576 = vunpack.c.l.b16 %v274
    %v577 = vunpack.c.l.b16 %v275
    %v578 = vunpack.c.l.b16 %v276
    %v579 = vunpack.c.l.b16 %v277
    %v580 = vunpack.c.l.b16 %v278
    %v581 = vunpack.c.l.b16 %v279
    %v582 = vunpack.c.l.b16 %v280
    %v583 = vunpack.c.l.b16 %v281
    %v584 = vunpack.c.l.b16 %v282
    %v585 = vunpack.c.l.b16 %v283
    %v586 = vunpack.c.l.b16 %v284
    %v587 = vunpack.c.l.b16 %v285
    %v588 = vunpack.c.l.b16 %v286
    %v589 = vunpack.c.l.b16 %v287
    %v590 = vunpack.c.l.b16 %v288
    %v591 = vunpack.c.l.b16 %v289
    %v592 = vunpack.c.l.b16 %v290
    %v593 = vunpack.c.l.b16 %v291
    %v594 = vunpack.c.l.b16 %v292
    %v595 = vunpack.c.l.b16 %v293
    %v596 = vunpack.c.l.b16 %v294
    %v597 = vunpack.c.l.b16 %v295
    %v598 = vunpack.c.l.b16 %v296
    %v599 = vunpack.c.l.b16 %v297
    %v600 = vunpack.c.l.b16 %v298
    %v601 = vunpack.c.l.b16 %v299
    %v602 = vunpack.c.l.b16 %v300
    %v603 = vunpack.c.l.b16 %v301
    %v604 = vunpack.c.l.b16 %v302
    %v605 = vunpack.c.l.b16 %v303
    %v606 = vunpack.c.l.b16 %v304
    %v607 = vunpack.c.l.b16 %v305
    %v608 = vunpack.c.l.b16 %v306
    %v609 = vunpack.c.l.b16 %v307
    %v610 = vunpack.c.l.b16 %v308
    %v611 = vunpack.c.l.b16 %v309
    %v612 = vunpack.c.l.b16 %v310
    %v613 = vunpack.c.l.b16 %v311
    %v614 = vunpack.c.l.b16 %v312
    %v615 = vunpack.c.l.b16 %v313
    %v616 = vunpack.c.l.b16 %v314
    %v617 = vunpack.c.l.b16 %v315
    %v618 = vunpack.c.l.b16 %v316
    %v619 = vunpack.c.l.b16 %v317
    %v620 = vunpack.c.l.b16 %v318
    %v621 = vunpack.c.l.b16 %v319
    %v622 = vunpack.c.l.b16 %v320
    %v623 = vunpack.c.l.b16 %v321
    %v624 = vunpack.c.l.b16 %v322
    %v625 = vunpack.c.l.b16 %v323
    %v626 = vunpack.c.l.b16 %v324
    %v627 = vunpack.c.l.b16 %v325
    %v628 = vunpack.c.l.b16 %v326
    %v629 = vunpack.c.l.b16 %v327
    %v630 = vunpack.c.l.b16 %v328
    %v631 = vunpack.c.l.b16 %v329
    %v632 = vunpack.c.l.b16 %v330
    %v633 = vunpack.c.l.b16 %v331
    %v634 = vunpack.c.l.b16 %v332
    %v635 = vunpack.c.l.b16 %v333
    %v636 = vunpack.c.l.b16 %v334
    %v637 = vunpack.c.l.b16 %v335
    %v638 = vunpack.c.l.b16 %v336
    %v639 = vunpack.c.l.b16 %v337
    %v640 = vunpack.c.l.b16 %v338
    %v641 = vunpack.c.l.b16 %v339
    %v642 = vunpack.c.l.b16 %v340
    %v643 = vunpack.c.l.b16 %v341
    %v644 = vunpack.c.l.b16 %v342
    %v645 = vunpack.c.l.b16 %v343
    %v646 = vunpack.c.l.b16 %v344
    %v647 = vunpack.c.l.b16 %v345
    %v648 = vunpack.c.l.b16 %v346
    %v649 = vunpack.c.l.b16 %v347
    %v650 = vunpack.c.l.b16 %v348
    %v651 = vunpack.c.l.b16 %v349
    %v652 = vunpack.c.l.b16 %v350
    %v653 = vunpack.c.l.b16 %v351
    %v654 = vunpack.c.l.b16 %v352
    %v655 = vunpack.c.l.b16 %v353
    %v656 = vunpack.c.l.b16 %v354
    %v657 = vunpack.c.l.b16 %v355
    %v658 = vunpack.c.l.b16 %v356
    %v659 = vunpack.c.l.b16 %v357
    %v660 = vunpack.c.l.b16 %v358
    %v661 = vunpack.c.l.b16 %v359
    %v662 = vunpack.c.l.b16 %v360
    %v663 = vunpack.c.l.b16 %v361
    %v664 = vunpack.c.l.b16 %v362
    %v665 = vunpack.c.l.b16 %v363
    %v666 = vunpack.c.l.b16 %v364
    %v667 = vunpack.c.l.b16 %v365
    %v668 = vunpack.c.l.b16 %v366
    %v669 = vunpack.c.l.b16 %v367
    %v670 = vunpack.c.l.b16 %v368
    %v671 = vunpack.c.l.b16 %v369
    %v672 = vunpack.c.l.b16 %v370
    %v673 = vunpack.c.l.b16 %v371
    %v674 = vunpack.c.l.b16 %v372
    %v675 = vunpack.c.l.b16 %v373
    %v676 = vunpack.c.l.b16 %v374
    %v677 = vunpack.c.l.b16 %v375
    %v678 = vunpack.c.l.b16 %v376
    %v679 = vunpack.c.l.b16 %v377
    %v680 = vunpack.c.l.b16 %v378
    %v681 = vunpack.c.l.b16 %v379
    %v682 = vunpack.c.l.b16 %v380
    %v683 = vunpack.c.l.b16 %v381
    %v684 = vunpack.c.l.b16 %v382
    %v685 = vunpack.c.l.b16 %v383
    %v686 = vunpack.c.l.b16 %v384
    %v687 = vunpack.c.l.b16 %v385
    %v688 = vunpack.c.l.b16 %v386
    %v689 = vunpack.c.l.b16 %v387
    %v690 = vunpack.c.l.b16 %v388
    %v691 = vunpack.c.l.b16 %v389
    %v692 = vunpack.c.l.b16 %v390
    %v693 = vunpack.c.l.b16 %v391
    %v694 = vunpack.c.l.b16 %v392
    %v695 = vunpack.c.l.b16 %v393
    %v696 = vunpack.c.l.b16 %v394
    %v697 = vunpack.c.l.b16 %v395
    %v698 = vunpack.c.l.b16 %v396
    %v699 = vunpack.c.l.b16 %v397
    %v700 = vunpack.c.l.b16 %v398
    %v701 = vunpack.c.l.b16 %v399
    %v702 = vunpack.c.l.b16 %v400
    %v703 = vunpack.c.l.b16 %v401
    %v704 = vunpack.c.l.b16 %v402
    %v705 = vunpack.c.l.b16 %v403
    %v706 = vunpack.c.l.b16 %v404
    %v707 = vunpack.c.l.b16 %v405
    %v708 = vunpack.c.l.b16 %v406
    %v709 = vunpack.c.l.b16 %v407
    %v710 = vunpack.c.l.b16 %v408
    %v711 = vunpack.c.l.b16 %v409
    %v712 = vunpack.c.l.b16 %v410
    %v713 = vpack.c.b16 %v563, %v562
    %v714 = vpack.c.b16 %v565, %v564
    %v715 = vpack.c.b16 %v567, %v566
    %v716 = vpack.c.b16 %v569, %v568
    %v717 = vpack.c.b16 %v571, %v570
    %v718 = vpack.c.b16 %v573, %v572
    %v719 = vpack.c.b16 %v575, %v574
    %v720 = vpack.c.b16 %v577, %v576
    %v721 = vpack.c.b16 %v579, %v578
    %v722 = vpack.c.b16 %v581, %v580
    %v723 = vpack.c.b16 %v583, %v582
    %v724 = vpack.c.b16 %v585, %v584
    %v725 = vpack.c.b16 %v587, %v586
    %v726 = vpack.c.b16 %v589, %v588
    %v727 = vpack.c.b16 %v591, %v590
    %v728 = vpack.c.b16 %v593, %v592
    %v729 = vpack.c.b16 %v595, %v594
    %v730 = vpack.c.b16 %v597, %v596
    %v731 = vpack.c.b16 %v599, %v598
    %v732 = vpack.c.b16 %v601, %v600
    %v733 = vpack.c.b16 %v603, %v602
    %v734 = vpack.c.b16 %v605, %v604
    %v735 = vpack.c.b16 %v607, %v606
    %v736 = vpack.c.b16 %v609, %v608
    %v737 = vpack.c.b16 %v611, %v610
    %v738 = vpack.c.b16 %v613, %v612
    %v739 = vpack.c.b16 %v615, %v614
    %v740 = vpack.c.b16 %v617, %v616
    %v741 = vpack.c.b16 %v619, %v618
    %v742 = vpack.c.b16 %v621, %v620
    %v743 = vpack.c.b16 %v623, %v622
    %v744 = vpack.c.b16 %v625, %v624
    %v745 = vpack.c.b16 %v627, %v626
    %v746 = vpack.c.b16 %v629, %v628
    %v747 = vpack.c.b16 %v631, %v630
    %v748 = vpack.c.b16 %v633, %v632
    %v749 = vpack.c.b16 %v635, %v634
    %v750 = vpack.c.b16 %v637, %v636
    %v751 = vpack.c.b16 %v639, %v638
    %v752 = vpack.c.b16 %v641, %v640
    %v753 = vpack.c.b16 %v643, %v642
    %v754 = vpack.c.b16 %v645, %v644
    %v755 = vpack.c.b16 %v647, %v646
    %v756 = vpack.c.b16 %v649, %v648
    %v757 = vpack.c.b16 %v651, %v650
    %v758 = vpack.c.b16 %v653, %v652
    %v759 = vpack.c.b16 %v655, %v654
    %v760 = vpack.c.b16 %v657, %v656
    %v761 = vpack.c.b16 %v659, %v658
    %v762 = vpack.c.b16 %v661, %v660
    %v763 = vpack.c.b16 %v663, %v662
    %v764 = vpack.c.b16 %v665, %v664
    %v765 = vpack.c.b16 %v667, %v666
    %v766 = vpack.c.b16 %v669, %v668
    %v767 = vpack.c.b16 %v671, %v670
    %v768 = vpack.c.b16 %v673, %v672
    %v769 = vpack.c.b16 %v675, %v674
    %v770 = vpack.c.b16 %v677, %v676
    %v771 = vpack.c.b16 %v679, %v678
    %v772 = vpack.c.b16 %v681, %v680
    %v773 = vpack.c.b16 %v683, %v682
    %v774 = vpack.c.b16 %v685, %v684
    %v775 = vpack.c.b16 %v687, %v686
    %v776 = vpack.c.b16 %v689, %v688
    %v777 = vpack.c.b16 %v691, %v690
    %v778 = vpack.c.b16 %v693, %v692
    %v779 = vpack.c.b16 %v695, %v694
    %v780 = vpack.c.b16 %v697, %v696
    %v781 = vpack.c.b16 %v699, %v698
    %v782 = vpack.c.b16 %v701, %v700
    %v783 = vpack.c.b16 %v703, %v702
    %v784 = vpack.c.b16 %v705, %v704
    %v785 = vpack.c.b16 %v707, %v706
    %v786 = vpack.c.b16 %v709, %v708
    %v787 = vpack.c.b16 %v711, %v710
    %v788 = vpack.c.b16 %v712, %v712
    %vm864 = vcmask 441344
    %v866 = vsel %vm864, %v259, 0
    %vm868 = vcmask 1042432
    %v870 = vsel %vm868, %v788, 0
    %872 = vmatprep.subr.bf16.mxu0 0
    %873 = vmatpush1.bf16.msra.mxu0 %v713
    %874 = vmatprep.subr.bf16.mxu0 0
    %875 = vmatpush1.bf16.msra.mxu0 %v714
    %876 = vmatprep.subr.bf16.mxu0 0
    %877 = vmatpush1.bf16.msra.mxu0 %v715
    %878 = vmatprep.subr.bf16.mxu0 0
    %879 = vmatpush1.bf16.msra.mxu0 %v716
    %880 = vmatprep.subr.bf16.mxu0 0
    %881 = vmatpush1.bf16.msra.mxu0 %v717
    %882 = vmatprep.subr.bf16.mxu0 0
    %883 = vmatpush1.bf16.msra.mxu0 %v718
    %884 = vmatprep.subr.bf16.mxu0 0
    %885 = vmatpush1.bf16.msra.mxu0 %v719
    %886 = vmatprep.subr.bf16.mxu0 0
    %887 = vmatpush1.bf16.msra.mxu0 %v720
    %888 = vmatprep.subr.bf16.mxu0 0
    %889 = vmatpush1.bf16.msra.mxu0 %v721
    %890 = vmatprep.subr.bf16.mxu0 0
    %891 = vmatpush1.bf16.msra.mxu0 %v722
    %892 = vmatprep.subr.bf16.mxu0 0
    %893 = vmatpush1.bf16.msra.mxu0 %v723
    %894 = vmatprep.subr.bf16.mxu0 0
    %895 = vmatpush1.bf16.msra.mxu0 %v724
    %896 = vmatprep.subr.bf16.mxu0 0
    %897 = vmatpush1.bf16.msra.mxu0 %v725
    %898 = vmatprep.subr.bf16.mxu0 0
    %899 = vmatpush1.bf16.msra.mxu0 %v726
    %900 = vmatprep.subr.bf16.mxu0 0
    %901 = vmatpush1.bf16.msra.mxu0 %v727
    %902 = vmatprep.subr.bf16.mxu0 0
    %903 = vmatpush1.bf16.msra.mxu0 %v728
    %904 = vmatprep.mubr.bf16.mxu0 %v251
    %905 = vmatmul.mubr.bf16.gmra.mrb[0].mxu0 %v250
    %v906 = vpop.f32.mrb[0].mxu0
    %v907 = vadd.f32 0.0, %v906
    %v908 = vpop.f32.mrb[0].mxu0
    %v909 = vpop.f32.mrb[0].mxu0
    %v910 = vpop.f32.mrb[0].mxu0
    %911 = vdwg.mxu0
    %912 = vmatprep.subr.bf16.mxu0 0
    %913 = vmatpush1.bf16.msra.mxu0 %v729
    %914 = vmatprep.subr.bf16.mxu0 0
    %915 = vmatpush1.bf16.msra.mxu0 %v730
    %916 = vmatprep.subr.bf16.mxu0 0
    %917 = vmatpush1.bf16.msra.mxu0 %v731
    %918 = vmatprep.subr.bf16.mxu0 0
    %919 = vmatpush1.bf16.msra.mxu0 %v732
    %920 = vmatprep.subr.bf16.mxu0 0
    %921 = vmatpush1.bf16.msra.mxu0 %v733
    %922 = vmatprep.subr.bf16.mxu0 0
    %923 = vmatpush1.bf16.msra.mxu0 %v734
    %924 = vmatprep.subr.bf16.mxu0 0
    %925 = vmatpush1.bf16.msra.mxu0 %v735
    %926 = vmatprep.subr.bf16.mxu0 0
    %927 = vmatpush1.bf16.msra.mxu0 %v736
    %928 = vmatprep.subr.bf16.mxu0 0
    %929 = vmatpush1.bf16.msra.mxu0 %v737
    %930 = vmatprep.subr.bf16.mxu0 0
    %931 = vmatpush1.bf16.msra.mxu0 %v738
    %932 = vmatprep.subr.bf16.mxu0 0
    %933 = vmatpush1.bf16.msra.mxu0 %v739
    %934 = vmatprep.subr.bf16.mxu0 0
    %935 = vmatpush1.bf16.msra.mxu0 %v740
    %936 = vmatprep.subr.bf16.mxu0 0
    %937 = vmatpush1.bf16.msra.mxu0 %v741
    %938 = vmatprep.subr.bf16.mxu0 0
    %939 = vmatpush1.bf16.msra.mxu0 %v742
    %940 = vmatprep.subr.bf16.mxu0 0
    %941 = vmatpush1.bf16.msra.mxu0 %v743
    %942 = vmatprep.subr.bf16.mxu0 0
    %943 = vmatpush1.bf16.msra.mxu0 %v744
    %944 = vmatprep.mubr.bf16.mxu0 %v253
    %945 = vmatmul.mubr.bf16.gmra.mrb[0].mxu0 %v252
    %v946 = vpop.f32.mrb[0].mxu0
    %v947 = vadd.f32 %v907, %v946
    %v948 = vpop.f32.mrb[0].mxu0
    %v949 = vpop.f32.mrb[0].mxu0
    %v950 = vpop.f32.mrb[0].mxu0
    %951 = vdwg.mxu0
    %952 = vmatprep.subr.bf16.mxu0 0
    %953 = vmatpush1.bf16.msra.mxu0 %v745
    %954 = vmatprep.subr.bf16.mxu0 0
    %955 = vmatpush1.bf16.msra.mxu0 %v746
    %956 = vmatprep.subr.bf16.mxu0 0
    %957 = vmatpush1.bf16.msra.mxu0 %v747
    %958 = vmatprep.subr.bf16.mxu0 0
    %959 = vmatpush1.bf16.msra.mxu0 %v748
    %960 = vmatprep.subr.bf16.mxu0 0
    %961 = vmatpush1.bf16.msra.mxu0 %v749
    %962 = vmatprep.subr.bf16.mxu0 0
    %963 = vmatpush1.bf16.msra.mxu0 %v750
    %964 = vmatprep.subr.bf16.mxu0 0
    %965 = vmatpush1.bf16.msra.mxu0 %v751
    %966 = vmatprep.subr.bf16.mxu0 0
    %967 = vmatpush1.bf16.msra.mxu0 %v752
    %968 = vmatprep.subr.bf16.mxu0 0
    %969 = vmatpush1.bf16.msra.mxu0 %v753
    %970 = vmatprep.subr.bf16.mxu0 0
    %971 = vmatpush1.bf16.msra.mxu0 %v754
    %972 = vmatprep.subr.bf16.mxu0 0
    %973 = vmatpush1.bf16.msra.mxu0 %v755
    %974 = vmatprep.subr.bf16.mxu0 0
    %975 = vmatpush1.bf16.msra.mxu0 %v756
    %976 = vmatprep.subr.bf16.mxu0 0
    %977 = vmatpush1.bf16.msra.mxu0 %v757
    %978 = vmatprep.subr.bf16.mxu0 0
    %979 = vmatpush1.bf16.msra.mxu0 %v758
    %980 = vmatprep.subr.bf16.mxu0 0
    %981 = vmatpush1.bf16.msra.mxu0 %v759
    %982 = vmatprep.subr.bf16.mxu0 0
    %983 = vmatpush1.bf16.msra.mxu0 %v760
    %984 = vmatprep.mubr.bf16.mxu0 %v255
    %985 = vmatmul.mubr.bf16.gmra.mrb[0].mxu0 %v254
    %v986 = vpop.f32.mrb[0].mxu0
    %v987 = vadd.f32 %v947, %v986
    %v988 = vpop.f32.mrb[0].mxu0
    %v989 = vpop.f32.mrb[0].mxu0
    %v990 = vpop.f32.mrb[0].mxu0
    %991 = vdwg.mxu0
    %992 = vmatprep.subr.bf16.mxu0 0
    %993 = vmatpush1.bf16.msra.mxu0 %v761
    %994 = vmatprep.subr.bf16.mxu0 0
    %995 = vmatpush1.bf16.msra.mxu0 %v762
    %996 = vmatprep.subr.bf16.mxu0 0
    %997 = vmatpush1.bf16.msra.mxu0 %v763
    %998 = vmatprep.subr.bf16.mxu0 0
    %999 = vmatpush1.bf16.msra.mxu0 %v764
    %1000 = vmatprep.subr.bf16.mxu0 0
    %1001 = vmatpush1.bf16.msra.mxu0 %v765
    %1002 = vmatprep.subr.bf16.mxu0 0
    %1003 = vmatpush1.bf16.msra.mxu0 %v766
    %1004 = vmatprep.subr.bf16.mxu0 0
    %1005 = vmatpush1.bf16.msra.mxu0 %v767
    %1006 = vmatprep.subr.bf16.mxu0 0
    %1007 = vmatpush1.bf16.msra.mxu0 %v768
    %1008 = vmatprep.subr.bf16.mxu0 0
    %1009 = vmatpush1.bf16.msra.mxu0 %v769
    %1010 = vmatprep.subr.bf16.mxu0 0
    %1011 = vmatpush1.bf16.msra.mxu0 %v770
    %1012 = vmatprep.subr.bf16.mxu0 0
    %1013 = vmatpush1.bf16.msra.mxu0 %v771
    %1014 = vmatprep.subr.bf16.mxu0 0
    %1015 = vmatpush1.bf16.msra.mxu0 %v772
    %1016 = vmatprep.subr.bf16.mxu0 0
    %1017 = vmatpush1.bf16.msra.mxu0 %v773
    %1018 = vmatprep.subr.bf16.mxu0 0
    %1019 = vmatpush1.bf16.msra.mxu0 %v774
    %1020 = vmatprep.subr.bf16.mxu0 0
    %1021 = vmatpush1.bf16.msra.mxu0 %v775
    %1022 = vmatprep.subr.bf16.mxu0 0
    %1023 = vmatpush1.bf16.msra.mxu0 %v776
    %1024 = vmatprep.mubr.bf16.mxu0 %v257
    %1025 = vmatmul.mubr.bf16.gmra.mrb[0].mxu0 %v256
    %v1026 = vpop.f32.mrb[0].mxu0
    %v1027 = vadd.f32 %v987, %v1026
    %v1028 = vpop.f32.mrb[0].mxu0
    %v1029 = vpop.f32.mrb[0].mxu0
    %v1030 = vpop.f32.mrb[0].mxu0
    %1031 = vdwg.mxu0
    %1032 = vmatprep.subr.bf16.mxu0 0
    %1033 = vmatpush1.bf16.msra.mxu0 %v777
    %1034 = vmatprep.subr.bf16.mxu0 0
    %1035 = vmatpush1.bf16.msra.mxu0 %v778
    %1036 = vmatprep.subr.bf16.mxu0 0
    %1037 = vmatpush1.bf16.msra.mxu0 %v779
    %1038 = vmatprep.subr.bf16.mxu0 0
    %1039 = vmatpush1.bf16.msra.mxu0 %v780
    %1040 = vmatprep.subr.bf16.mxu0 0
    %1041 = vmatpush1.bf16.msra.mxu0 %v781
    %1042 = vmatprep.subr.bf16.mxu0 0
    %1043 = vmatpush1.bf16.msra.mxu0 %v782
    %1044 = vmatprep.subr.bf16.mxu0 0
    %1045 = vmatpush1.bf16.msra.mxu0 %v783
    %1046 = vmatprep.subr.bf16.mxu0 0
    %1047 = vmatpush1.bf16.msra.mxu0 %v784
    %1048 = vmatprep.subr.bf16.mxu0 0
    %1049 = vmatpush1.bf16.msra.mxu0 %v785
    %1050 = vmatprep.subr.bf16.mxu0 0
    %1051 = vmatpush1.bf16.msra.mxu0 %v786
    %1052 = vmatprep.subr.bf16.mxu0 0
    %1053 = vmatpush1.bf16.msra.mxu0 %v787
    %1054 = vmatprep.subr.bf16.mxu0 0
    %1055 = vmatpush1.bf16.msra.mxu0 %v870
    %1056 = vmatprep.subr.bf16.mxu0 0
    %1057 = vmatpush1.bf16.msra.mxu0 0
    %1058 = vmatprep.subr.bf16.mxu0 0
    %1059 = vmatpush1.bf16.msra.mxu0 0
    %1060 = vmatprep.subr.bf16.mxu0 0
    %1061 = vmatpush1.bf16.msra.mxu0 0
    %1062 = vmatprep.subr.bf16.mxu0 0
    %1063 = vmatpush1.bf16.msra.mxu0 0
    %1064 = vmatprep.mubr.bf16.mxu0 %v866
    %1065 = vmatmul.mubr.bf16.gmra.mrb[0].mxu0 %v258
    %v1066 = vpop.f32.mrb[0].mxu0
    %v1067 = vadd.f32 %v1027, %v1066
    %v1068 = vpop.f32.mrb[0].mxu0
    %v1069 = vpop.f32.mrb[0].mxu0
    %v1070 = vpop.f32.mrb[0].mxu0
    %1071 = vdwg.mxu0
    %v1072 = vmax.f32 %v1067, 0.0
    %v1073 = vld [vmem:[#allocation5] sm:$0xff]
    %v1074 = vld [vmem:[#allocation5 + $0x8] sm:$0xff]
    %v1077 = vcombine.high %v1073, %v1073
    %v1079 = vunpack.c.l.s4 1983009808
    %v1080 = vunpack.c.0.s8 %v1079
    %v1081 = vlaneseq
    %v1082 = vshrl.u32 %v1081, 7
    %v1083 = vsub.s32 %v1080, %v1082
    %v1084 = vrot.slane %v1073, %v1083
    %v1086 = vunpack.c.l.s4 1983009808
    %v1087 = vunpack.c.0.s8 %v1086
    %v1088 = vlaneseq
    %v1089 = vshrl.u32 %v1088, 7
    %v1090 = vsub.s32 %v1087, %v1089
    %v1091 = vrot.slane %v1077, %v1090
    %v1092 = vcombine.high %v1084, %v1084
    %v1093 = vcombine.high %v1091, %v1091
    %v1094 = vcombine.high %v1074, %v1074
    %v1096 = vunpack.c.l.s4 1983009808
    %v1097 = vunpack.c.0.s8 %v1096
    %v1098 = vlaneseq
    %v1099 = vshrl.u32 %v1098, 7
    %v1100 = vsub.s32 %v1097, %v1099
    %v1101 = vrot.slane %v1074, %v1100
    %v1103 = vunpack.c.l.s4 1983009808
    %v1104 = vunpack.c.0.s8 %v1103
    %v1105 = vlaneseq
    %v1106 = vshrl.u32 %v1105, 7
    %v1107 = vsub.s32 %v1104, %v1106
    %v1108 = vrot.slane %v1094, %v1107
    %v1109 = vcombine.high %v1101, %v1101
    %v1110 = vcombine.high %v1108, %v1108
    %v1119 = vpack.c.bf16 %v1084, %v1084
    %v1120 = vpack.c.bf16 %v1092, %v1092
    %v1121 = vpack.c.bf16 %v1091, %v1091
    %v1122 = vpack.c.bf16 %v1093, %v1093
    %v1123 = vpack.c.bf16 %v1101, %v1101
    %v1124 = vpack.c.bf16 %v1109, %v1109
    %v1125 = vpack.c.bf16 %v1108, %v1108
    %v1126 = vpack.c.bf16 %v1110, %v1110
    %v1127 = vld [vmem:[#allocation10] sm:$0xf]
    %v1128 = vld [vmem:[#allocation10 + $0x4] sm:$0xf]
    %v1129 = vld [vmem:[#allocation10 + $0x8] sm:$0xf]
    %v1130 = vld [vmem:[#allocation10 + $0xc] sm:$0xf]
    %v1131 = vld [vmem:[#allocation10 + $0x10] sm:$0xf]
    %v1132 = vld [vmem:[#allocation10 + $0x14] sm:$0xf]
    %v1133 = vld [vmem:[#allocation10 + $0x18] sm:$0xf]
    %v1134 = vld [vmem:[#allocation10 + $0x1c] sm:$0xf]
    %v1135 = vld [vmem:[#allocation10 + $0x20] sm:$0xf]
    %v1136 = vld [vmem:[#allocation10 + $0x24] sm:$0xf]
    %v1137 = vld [vmem:[#allocation10 + $0x28] sm:$0xf]
    %v1138 = vld [vmem:[#allocation10 + $0x2c] sm:$0xf]
    %v1139 = vld [vmem:[#allocation10 + $0x30] sm:$0xf]
    %v1140 = vld [vmem:[#allocation10 + $0x34] sm:$0xf]
    %v1141 = vld [vmem:[#allocation10 + $0x38] sm:$0xf]
    %v1142 = vld [vmem:[#allocation10 + $0x3c] sm:$0xf]
    %v1143 = vld [vmem:[#allocation10 + $0x40] sm:$0xf]
    %v1144 = vld [vmem:[#allocation10 + $0x44] sm:$0xf]
    %v1145 = vld [vmem:[#allocation10 + $0x48] sm:$0xf]
    %v1146 = vld [vmem:[#allocation10 + $0x4c] sm:$0xf]
    %v1147 = vld [vmem:[#allocation10 + $0x50] sm:$0xf]
    %v1148 = vld [vmem:[#allocation10 + $0x54] sm:$0xf]
    %v1149 = vld [vmem:[#allocation10 + $0x58] sm:$0xf]
    %v1150 = vld [vmem:[#allocation10 + $0x5c] sm:$0xf]
    %v1151 = vld [vmem:[#allocation10 + $0x60] sm:$0xf]
    %v1152 = vld [vmem:[#allocation10 + $0x64] sm:$0xf]
    %v1153 = vld [vmem:[#allocation10 + $0x68] sm:$0xf]
    %v1154 = vld [vmem:[#allocation10 + $0x6c] sm:$0xf]
    %v1155 = vld [vmem:[#allocation10 + $0x70] sm:$0xf]
    %v1156 = vld [vmem:[#allocation10 + $0x74] sm:$0xf]
    %v1157 = vld [vmem:[#allocation10 + $0x78] sm:$0xf]
    %v1158 = vld [vmem:[#allocation10 + $0x7c] sm:$0xf]
    %v1159 = vld [vmem:[#allocation10 + $0x80] sm:$0xf]
    %v1160 = vld [vmem:[#allocation10 + $0x84] sm:$0xf]
    %v1161 = vld [vmem:[#allocation10 + $0x88] sm:$0xf]
    %v1162 = vld [vmem:[#allocation10 + $0x8c] sm:$0xf]
    %v1163 = vld [vmem:[#allocation10 + $0x90] sm:$0xf]
    %v1164 = vld [vmem:[#allocation10 + $0x94] sm:$0xf]
    %v1165 = vld [vmem:[#allocation10 + $0x98] sm:$0xf]
    %v1166 = vld [vmem:[#allocation10 + $0x9c] sm:$0xf]
    %v1167 = vld [vmem:[#allocation10 + $0xa0] sm:$0xf]
    %v1168 = vld [vmem:[#allocation10 + $0xa4] sm:$0xf]
    %v1169 = vld [vmem:[#allocation10 + $0xa8] sm:$0xf]
    %v1170 = vld [vmem:[#allocation10 + $0xac] sm:$0xf]
    %v1171 = vld [vmem:[#allocation10 + $0xb0] sm:$0xf]
    %v1172 = vld [vmem:[#allocation10 + $0xb4] sm:$0xf]
    %v1173 = vld [vmem:[#allocation10 + $0xb8] sm:$0xf]
    %v1174 = vld [vmem:[#allocation10 + $0xbc] sm:$0xf]
    %v1175 = vld [vmem:[#allocation10 + $0xc0] sm:$0xf]
    %v1176 = vld [vmem:[#allocation10 + $0xc4] sm:$0xf]
    %v1177 = vld [vmem:[#allocation10 + $0xc8] sm:$0xf]
    %v1178 = vld [vmem:[#allocation10 + $0xcc] sm:$0xf]
    %v1179 = vld [vmem:[#allocation10 + $0xd0] sm:$0xf]
    %v1180 = vld [vmem:[#allocation10 + $0xd4] sm:$0xf]
    %v1181 = vld [vmem:[#allocation10 + $0xd8] sm:$0xf]
    %v1182 = vld [vmem:[#allocation10 + $0xdc] sm:$0xf]
    %v1183 = vld [vmem:[#allocation10 + $0xe0] sm:$0xf]
    %v1184 = vld [vmem:[#allocation10 + $0xe4] sm:$0xf]
    %v1185 = vld [vmem:[#allocation10 + $0xe8] sm:$0xf]
    %v1186 = vld [vmem:[#allocation10 + $0xec] sm:$0xf]
    %v1187 = vld [vmem:[#allocation10 + $0xf0] sm:$0xf]
    %v1188 = vld [vmem:[#allocation10 + $0xf4] sm:$0xf]
    %v1189 = vld [vmem:[#allocation10 + $0xf8] sm:$0xf]
    %v1190 = vld [vmem:[#allocation10 + $0xfc] sm:$0xf]
    %v1191 = vld [vmem:[#allocation10 + $0x100] sm:$0xf]
    %v1192 = vld [vmem:[#allocation10 + $0x104] sm:$0xf]
    %v1193 = vld [vmem:[#allocation10 + $0x108] sm:$0xf]
    %v1194 = vld [vmem:[#allocation10 + $0x10c] sm:$0xf]
    %v1195 = vld [vmem:[#allocation10 + $0x110] sm:$0xf]
    %v1196 = vld [vmem:[#allocation10 + $0x114] sm:$0xf]
    %v1197 = vld [vmem:[#allocation10 + $0x118] sm:$0xf]
    %v1198 = vld [vmem:[#allocation10 + $0x11c] sm:$0xf]
    %v1199 = vld [vmem:[#allocation10 + $0x120] sm:$0xf]
    %v1200 = vld [vmem:[#allocation10 + $0x124] sm:$0xf]
    %v1201 = vld [vmem:[#allocation10 + $0x128] sm:$0xf]
    %v1202 = vld [vmem:[#allocation10 + $0x12c] sm:$0xf]
    %v1203 = vld [vmem:[#allocation10 + $0x130] sm:$0xf]
    %v1204 = vld [vmem:[#allocation10 + $0x134] sm:$0xf]
    %v1205 = vld [vmem:[#allocation10 + $0x138] sm:$0xf]
    %v1206 = vld [vmem:[#allocation10 + $0x13c] sm:$0xf]
    %v1207 = vld [vmem:[#allocation10 + $0x140] sm:$0xf]
    %v1208 = vld [vmem:[#allocation10 + $0x144] sm:$0xf]
    %v1209 = vld [vmem:[#allocation10 + $0x148] sm:$0xf]
    %v1210 = vld [vmem:[#allocation10 + $0x14c] sm:$0xf]
    %v1211 = vld [vmem:[#allocation10 + $0x150] sm:$0xf]
    %v1212 = vld [vmem:[#allocation10 + $0x154] sm:$0xf]
    %v1213 = vld [vmem:[#allocation10 + $0x158] sm:$0xf]
    %v1214 = vld [vmem:[#allocation10 + $0x15c] sm:$0xf]
    %v1215 = vld [vmem:[#allocation10 + $0x160] sm:$0xf]
    %v1216 = vld [vmem:[#allocation10 + $0x164] sm:$0xf]
    %v1217 = vld [vmem:[#allocation10 + $0x168] sm:$0xf]
    %v1218 = vld [vmem:[#allocation10 + $0x16c] sm:$0xf]
    %v1219 = vld [vmem:[#allocation10 + $0x170] sm:$0xf]
    %v1220 = vld [vmem:[#allocation10 + $0x174] sm:$0xf]
    %v1221 = vld [vmem:[#allocation10 + $0x178] sm:$0xf]
    %v1222 = vld [vmem:[#allocation10 + $0x17c] sm:$0xf]
    %v1223 = vld [vmem:[#allocation10 + $0x180] sm:$0xf]
    %v1224 = vld [vmem:[#allocation10 + $0x184] sm:$0xf]
    %v1225 = vld [vmem:[#allocation10 + $0x188] sm:$0xf]
    %v1226 = vld [vmem:[#allocation10 + $0x18c] sm:$0xf]
    %v1227 = vld [vmem:[#allocation10 + $0x190] sm:$0xf]
    %v1228 = vld [vmem:[#allocation10 + $0x194] sm:$0xf]
    %v1229 = vld [vmem:[#allocation10 + $0x198] sm:$0xf]
    %v1230 = vld [vmem:[#allocation10 + $0x19c] sm:$0xf]
    %v1231 = vld [vmem:[#allocation10 + $0x1a0] sm:$0xf]
    %v1232 = vld [vmem:[#allocation10 + $0x1a4] sm:$0xf]
    %v1233 = vld [vmem:[#allocation10 + $0x1a8] sm:$0xf]
    %v1234 = vld [vmem:[#allocation10 + $0x1ac] sm:$0xf]
    %v1235 = vld [vmem:[#allocation10 + $0x1b0] sm:$0xf]
    %v1236 = vld [vmem:[#allocation10 + $0x1b4] sm:$0xf]
    %v1237 = vld [vmem:[#allocation10 + $0x1b8] sm:$0xf]
    %v1238 = vld [vmem:[#allocation10 + $0x1bc] sm:$0xf]
    %v1239 = vld [vmem:[#allocation10 + $0x1c0] sm:$0x3]
    %v1353 = vunpack.c.l.b16 %v1127
    %v1354 = vunpack.c.l.b16 %v1128
    %v1355 = vunpack.c.l.b16 %v1129
    %v1356 = vunpack.c.l.b16 %v1130
    %v1357 = vunpack.c.l.b16 %v1131
    %v1358 = vunpack.c.l.b16 %v1132
    %v1359 = vunpack.c.l.b16 %v1133
    %v1360 = vunpack.c.l.b16 %v1134
    %v1361 = vunpack.c.l.b16 %v1135
    %v1362 = vunpack.c.l.b16 %v1136
    %v1363 = vunpack.c.l.b16 %v1137
    %v1364 = vunpack.c.l.b16 %v1138
    %v1365 = vunpack.c.l.b16 %v1139
    %v1366 = vunpack.c.l.b16 %v1140
    %v1367 = vunpack.c.l.b16 %v1141
    %v1368 = vunpack.c.l.b16 %v1142
    %v1369 = vunpack.c.l.b16 %v1143
    %v1370 = vunpack.c.l.b16 %v1144
    %v1371 = vunpack.c.l.b16 %v1145
    %v1372 = vunpack.c.l.b16 %v1146
    %v1373 = vunpack.c.l.b16 %v1147
    %v1374 = vunpack.c.l.b16 %v1148
    %v1375 = vunpack.c.l.b16 %v1149
    %v1376 = vunpack.c.l.b16 %v1150
    %v1377 = vunpack.c.l.b16 %v1151
    %v1378 = vunpack.c.l.b16 %v1152
    %v1379 = vunpack.c.l.b16 %v1153
    %v1380 = vunpack.c.l.b16 %v1154
    %v1381 = vunpack.c.l.b16 %v1155
    %v1382 = vunpack.c.l.b16 %v1156
    %v1383 = vunpack.c.l.b16 %v1157
    %v1384 = vunpack.c.l.b16 %v1158
    %v1385 = vunpack.c.l.b16 %v1159
    %v1386 = vunpack.c.l.b16 %v1160
    %v1387 = vunpack.c.l.b16 %v1161
    %v1388 = vunpack.c.l.b16 %v1162
    %v1389 = vunpack.c.l.b16 %v1163
    %v1390 = vunpack.c.l.b16 %v1164
    %v1391 = vunpack.c.l.b16 %v1165
    %v1392 = vunpack.c.l.b16 %v1166
    %v1393 = vunpack.c.l.b16 %v1167
    %v1394 = vunpack.c.l.b16 %v1168
    %v1395 = vunpack.c.l.b16 %v1169
    %v1396 = vunpack.c.l.b16 %v1170
    %v1397 = vunpack.c.l.b16 %v1171
    %v1398 = vunpack.c.l.b16 %v1172
    %v1399 = vunpack.c.l.b16 %v1173
    %v1400 = vunpack.c.l.b16 %v1174
    %v1401 = vunpack.c.l.b16 %v1175
    %v1402 = vunpack.c.l.b16 %v1176
    %v1403 = vunpack.c.l.b16 %v1177
    %v1404 = vunpack.c.l.b16 %v1178
    %v1405 = vunpack.c.l.b16 %v1179
    %v1406 = vunpack.c.l.b16 %v1180
    %v1407 = vunpack.c.l.b16 %v1181
    %v1408 = vunpack.c.l.b16 %v1182
    %v1409 = vunpack.c.l.b16 %v1183
    %v1410 = vunpack.c.l.b16 %v1184
    %v1411 = vunpack.c.l.b16 %v1185
    %v1412 = vunpack.c.l.b16 %v1186
    %v1413 = vunpack.c.l.b16 %v1187
    %v1414 = vunpack.c.l.b16 %v1188
    %v1415 = vunpack.c.l.b16 %v1189
    %v1416 = vunpack.c.l.b16 %v1190
    %v1417 = vunpack.c.l.b16 %v1191
    %v1418 = vunpack.c.l.b16 %v1192
    %v1419 = vunpack.c.l.b16 %v1193
    %v1420 = vunpack.c.l.b16 %v1194
    %v1421 = vunpack.c.l.b16 %v1195
    %v1422 = vunpack.c.l.b16 %v1196
    %v1423 = vunpack.c.l.b16 %v1197
    %v1424 = vunpack.c.l.b16 %v1198
    %v1425 = vunpack.c.l.b16 %v1199
    %v1426 = vunpack.c.l.b16 %v1200
    %v1427 = vunpack.c.l.b16 %v1201
    %v1428 = vunpack.c.l.b16 %v1202
    %v1429 = vunpack.c.l.b16 %v1203
    %v1430 = vunpack.c.l.b16 %v1204
    %v1431 = vunpack.c.l.b16 %v1205
    %v1432 = vunpack.c.l.b16 %v1206
    %v1433 = vunpack.c.l.b16 %v1207
    %v1434 = vunpack.c.l.b16 %v1208
    %v1435 = vunpack.c.l.b16 %v1209
    %v1436 = vunpack.c.l.b16 %v1210
    %v1437 = vunpack.c.l.b16 %v1211
    %v1438 = vunpack.c.l.b16 %v1212
    %v1439 = vunpack.c.l.b16 %v1213
    %v1440 = vunpack.c.l.b16 %v1214
    %v1441 = vunpack.c.l.b16 %v1215
    %v1442 = vunpack.c.l.b16 %v1216
    %v1443 = vunpack.c.l.b16 %v1217
    %v1444 = vunpack.c.l.b16 %v1218
    %v1445 = vunpack.c.l.b16 %v1219
    %v1446 = vunpack.c.l.b16 %v1220
    %v1447 = vunpack.c.l.b16 %v1221
    %v1448 = vunpack.c.l.b16 %v1222
    %v1449 = vunpack.c.l.b16 %v1223
    %v1450 = vunpack.c.l.b16 %v1224
    %v1451 = vunpack.c.l.b16 %v1225
    %v1452 = vunpack.c.l.b16 %v1226
    %v1453 = vunpack.c.l.b16 %v1227
    %v1454 = vunpack.c.l.b16 %v1228
    %v1455 = vunpack.c.l.b16 %v1229
    %v1456 = vunpack.c.l.b16 %v1230
    %v1457 = vunpack.c.l.b16 %v1231
    %v1458 = vunpack.c.l.b16 %v1232
    %v1459 = vunpack.c.l.b16 %v1233
    %v1460 = vunpack.c.l.b16 %v1234
    %v1461 = vunpack.c.l.b16 %v1235
    %v1462 = vunpack.c.l.b16 %v1236
    %v1463 = vunpack.c.l.b16 %v1237
    %v1464 = vunpack.c.l.b16 %v1238
    %v1465 = vunpack.c.l.b16 %v1239
    %v1466 = vpack.c.b16 %v1354, %v1353
    %v1467 = vpack.c.b16 %v1356, %v1355
    %v1468 = vpack.c.b16 %v1358, %v1357
    %v1469 = vpack.c.b16 %v1360, %v1359
    %v1470 = vpack.c.b16 %v1362, %v1361
    %v1471 = vpack.c.b16 %v1364, %v1363
    %v1472 = vpack.c.b16 %v1366, %v1365
    %v1473 = vpack.c.b16 %v1368, %v1367
    %v1474 = vpack.c.b16 %v1370, %v1369
    %v1475 = vpack.c.b16 %v1372, %v1371
    %v1476 = vpack.c.b16 %v1374, %v1373
    %v1477 = vpack.c.b16 %v1376, %v1375
    %v1478 = vpack.c.b16 %v1378, %v1377
    %v1479 = vpack.c.b16 %v1380, %v1379
    %v1480 = vpack.c.b16 %v1382, %v1381
    %v1481 = vpack.c.b16 %v1384, %v1383
    %v1482 = vpack.c.b16 %v1386, %v1385
    %v1483 = vpack.c.b16 %v1388, %v1387
    %v1484 = vpack.c.b16 %v1390, %v1389
    %v1485 = vpack.c.b16 %v1392, %v1391
    %v1486 = vpack.c.b16 %v1394, %v1393
    %v1487 = vpack.c.b16 %v1396, %v1395
    %v1488 = vpack.c.b16 %v1398, %v1397
    %v1489 = vpack.c.b16 %v1400, %v1399
    %v1490 = vpack.c.b16 %v1402, %v1401
    %v1491 = vpack.c.b16 %v1404, %v1403
    %v1492 = vpack.c.b16 %v1406, %v1405
    %v1493 = vpack.c.b16 %v1408, %v1407
    %v1494 = vpack.c.b16 %v1410, %v1409
    %v1495 = vpack.c.b16 %v1412, %v1411
    %v1496 = vpack.c.b16 %v1414, %v1413
    %v1497 = vpack.c.b16 %v1416, %v1415
    %v1498 = vpack.c.b16 %v1418, %v1417
    %v1499 = vpack.c.b16 %v1420, %v1419
    %v1500 = vpack.c.b16 %v1422, %v1421
    %v1501 = vpack.c.b16 %v1424, %v1423
    %v1502 = vpack.c.b16 %v1426, %v1425
    %v1503 = vpack.c.b16 %v1428, %v1427
    %v1504 = vpack.c.b16 %v1430, %v1429
    %v1505 = vpack.c.b16 %v1432, %v1431
    %v1506 = vpack.c.b16 %v1434, %v1433
    %v1507 = vpack.c.b16 %v1436, %v1435
    %v1508 = vpack.c.b16 %v1438, %v1437
    %v1509 = vpack.c.b16 %v1440, %v1439
    %v1510 = vpack.c.b16 %v1442, %v1441
    %v1511 = vpack.c.b16 %v1444, %v1443
    %v1512 = vpack.c.b16 %v1446, %v1445
    %v1513 = vpack.c.b16 %v1448, %v1447
    %v1514 = vpack.c.b16 %v1450, %v1449
    %v1515 = vpack.c.b16 %v1452, %v1451
    %v1516 = vpack.c.b16 %v1454, %v1453
    %v1517 = vpack.c.b16 %v1456, %v1455
    %v1518 = vpack.c.b16 %v1458, %v1457
    %v1519 = vpack.c.b16 %v1460, %v1459
    %v1520 = vpack.c.b16 %v1462, %v1461
    %v1521 = vpack.c.b16 %v1464, %v1463
    %v1522 = vpack.c.b16 %v1465, %v1465
    %vm1579 = vcmask 31744
    %v1581 = vsel %vm1579, %v1126, 0
    %vm1583 = vcmask 1041408
    %v1585 = vsel %vm1583, %v1522, 0
    %1587 = vmatprep.subr.bf16.mxu0 0
    %1588 = vmatpush1.bf16.msra.mxu0 %v1466
    %1589 = vmatprep.subr.bf16.mxu0 0
    %1590 = vmatpush1.bf16.msra.mxu0 %v1467
    %1591 = vmatprep.subr.bf16.mxu0 0
    %1592 = vmatpush1.bf16.msra.mxu0 %v1468
    %1593 = vmatprep.subr.bf16.mxu0 0
    %1594 = vmatpush1.bf16.msra.mxu0 %v1469
    %1595 = vmatprep.subr.bf16.mxu0 0
    %1596 = vmatpush1.bf16.msra.mxu0 %v1470
    %1597 = vmatprep.subr.bf16.mxu0 0
    %1598 = vmatpush1.bf16.msra.mxu0 %v1471
    %1599 = vmatprep.subr.bf16.mxu0 0
    %1600 = vmatpush1.bf16.msra.mxu0 %v1472
    %1601 = vmatprep.subr.bf16.mxu0 0
    %1602 = vmatpush1.bf16.msra.mxu0 %v1473
    %1603 = vmatprep.subr.bf16.mxu0 0
    %1604 = vmatpush1.bf16.msra.mxu0 %v1474
    %1605 = vmatprep.subr.bf16.mxu0 0
    %1606 = vmatpush1.bf16.msra.mxu0 %v1475
    %1607 = vmatprep.subr.bf16.mxu0 0
    %1608 = vmatpush1.bf16.msra.mxu0 %v1476
    %1609 = vmatprep.subr.bf16.mxu0 0
    %1610 = vmatpush1.bf16.msra.mxu0 %v1477
    %1611 = vmatprep.subr.bf16.mxu0 0
    %1612 = vmatpush1.bf16.msra.mxu0 %v1478
    %1613 = vmatprep.subr.bf16.mxu0 0
    %1614 = vmatpush1.bf16.msra.mxu0 %v1479
    %1615 = vmatprep.subr.bf16.mxu0 0
    %1616 = vmatpush1.bf16.msra.mxu0 %v1480
    %1617 = vmatprep.subr.bf16.mxu0 0
    %1618 = vmatpush1.bf16.msra.mxu0 %v1481
    %1619 = vmatprep.mubr.bf16.mxu0 %v1120
    %1620 = vmatmul.mubr.bf16.gmra.mrb[0].mxu0 %v1119
    %v1621 = vpop.f32.mrb[0].mxu0
    %v1622 = vadd.f32 0.0, %v1621
    %v1623 = vpop.f32.mrb[0].mxu0
    %v1624 = vpop.f32.mrb[0].mxu0
    %v1625 = vpop.f32.mrb[0].mxu0
    %1626 = vdwg.mxu0
    %1627 = vmatprep.subr.bf16.mxu0 0
    %1628 = vmatpush1.bf16.msra.mxu0 %v1482
    %1629 = vmatprep.subr.bf16.mxu0 0
    %1630 = vmatpush1.bf16.msra.mxu0 %v1483
    %1631 = vmatprep.subr.bf16.mxu0 0
    %1632 = vmatpush1.bf16.msra.mxu0 %v1484
    %1633 = vmatprep.subr.bf16.mxu0 0
    %1634 = vmatpush1.bf16.msra.mxu0 %v1485
    %1635 = vmatprep.subr.bf16.mxu0 0
    %1636 = vmatpush1.bf16.msra.mxu0 %v1486
    %1637 = vmatprep.subr.bf16.mxu0 0
    %1638 = vmatpush1.bf16.msra.mxu0 %v1487
    %1639 = vmatprep.subr.bf16.mxu0 0
    %1640 = vmatpush1.bf16.msra.mxu0 %v1488
    %1641 = vmatprep.subr.bf16.mxu0 0
    %1642 = vmatpush1.bf16.msra.mxu0 %v1489
    %1643 = vmatprep.subr.bf16.mxu0 0
    %1644 = vmatpush1.bf16.msra.mxu0 %v1490
    %1645 = vmatprep.subr.bf16.mxu0 0
    %1646 = vmatpush1.bf16.msra.mxu0 %v1491
    %1647 = vmatprep.subr.bf16.mxu0 0
    %1648 = vmatpush1.bf16.msra.mxu0 %v1492
    %1649 = vmatprep.subr.bf16.mxu0 0
    %1650 = vmatpush1.bf16.msra.mxu0 %v1493
    %1651 = vmatprep.subr.bf16.mxu0 0
    %1652 = vmatpush1.bf16.msra.mxu0 %v1494
    %1653 = vmatprep.subr.bf16.mxu0 0
    %1654 = vmatpush1.bf16.msra.mxu0 %v1495
    %1655 = vmatprep.subr.bf16.mxu0 0
    %1656 = vmatpush1.bf16.msra.mxu0 %v1496
    %1657 = vmatprep.subr.bf16.mxu0 0
    %1658 = vmatpush1.bf16.msra.mxu0 %v1497
    %1659 = vmatprep.mubr.bf16.mxu0 %v1122
    %1660 = vmatmul.mubr.bf16.gmra.mrb[0].mxu0 %v1121
    %v1661 = vpop.f32.mrb[0].mxu0
    %v1662 = vadd.f32 %v1622, %v1661
    %v1663 = vpop.f32.mrb[0].mxu0
    %v1664 = vpop.f32.mrb[0].mxu0
    %v1665 = vpop.f32.mrb[0].mxu0
    %1666 = vdwg.mxu0
    %1667 = vmatprep.subr.bf16.mxu0 0
    %1668 = vmatpush1.bf16.msra.mxu0 %v1498
    %1669 = vmatprep.subr.bf16.mxu0 0
    %1670 = vmatpush1.bf16.msra.mxu0 %v1499
    %1671 = vmatprep.subr.bf16.mxu0 0
    %1672 = vmatpush1.bf16.msra.mxu0 %v1500
    %1673 = vmatprep.subr.bf16.mxu0 0
    %1674 = vmatpush1.bf16.msra.mxu0 %v1501
    %1675 = vmatprep.subr.bf16.mxu0 0
    %1676 = vmatpush1.bf16.msra.mxu0 %v1502
    %1677 = vmatprep.subr.bf16.mxu0 0
    %1678 = vmatpush1.bf16.msra.mxu0 %v1503
    %1679 = vmatprep.subr.bf16.mxu0 0
    %1680 = vmatpush1.bf16.msra.mxu0 %v1504
    %1681 = vmatprep.subr.bf16.mxu0 0
    %1682 = vmatpush1.bf16.msra.mxu0 %v1505
    %1683 = vmatprep.subr.bf16.mxu0 0
    %1684 = vmatpush1.bf16.msra.mxu0 %v1506
    %1685 = vmatprep.subr.bf16.mxu0 0
    %1686 = vmatpush1.bf16.msra.mxu0 %v1507
    %1687 = vmatprep.subr.bf16.mxu0 0
    %1688 = vmatpush1.bf16.msra.mxu0 %v1508
    %1689 = vmatprep.subr.bf16.mxu0 0
    %1690 = vmatpush1.bf16.msra.mxu0 %v1509
    %1691 = vmatprep.subr.bf16.mxu0 0
    %1692 = vmatpush1.bf16.msra.mxu0 %v1510
    %1693 = vmatprep.subr.bf16.mxu0 0
    %1694 = vmatpush1.bf16.msra.mxu0 %v1511
    %1695 = vmatprep.subr.bf16.mxu0 0
    %1696 = vmatpush1.bf16.msra.mxu0 %v1512
    %1697 = vmatprep.subr.bf16.mxu0 0
    %1698 = vmatpush1.bf16.msra.mxu0 %v1513
    %1699 = vmatprep.mubr.bf16.mxu0 %v1124
    %1700 = vmatmul.mubr.bf16.gmra.mrb[0].mxu0 %v1123
    %v1701 = vpop.f32.mrb[0].mxu0
    %v1702 = vadd.f32 %v1662, %v1701
    %v1703 = vpop.f32.mrb[0].mxu0
    %v1704 = vpop.f32.mrb[0].mxu0
    %v1705 = vpop.f32.mrb[0].mxu0
    %1706 = vdwg.mxu0
    %1707 = vmatprep.subr.bf16.mxu0 0
    %1708 = vmatpush1.bf16.msra.mxu0 %v1514
    %1709 = vmatprep.subr.bf16.mxu0 0
    %1710 = vmatpush1.bf16.msra.mxu0 %v1515
    %1711 = vmatprep.subr.bf16.mxu0 0
    %1712 = vmatpush1.bf16.msra.mxu0 %v1516
    %1713 = vmatprep.subr.bf16.mxu0 0
    %1714 = vmatpush1.bf16.msra.mxu0 %v1517
    %1715 = vmatprep.subr.bf16.mxu0 0
    %1716 = vmatpush1.bf16.msra.mxu0 %v1518
    %1717 = vmatprep.subr.bf16.mxu0 0
    %1718 = vmatpush1.bf16.msra.mxu0 %v1519
    %1719 = vmatprep.subr.bf16.mxu0 0
    %1720 = vmatpush1.bf16.msra.mxu0 %v1520
    %1721 = vmatprep.subr.bf16.mxu0 0
    %1722 = vmatpush1.bf16.msra.mxu0 %v1521
    %1723 = vmatprep.subr.bf16.mxu0 0
    %1724 = vmatpush1.bf16.msra.mxu0 %v1585
    %1725 = vmatprep.subr.bf16.mxu0 0
    %1726 = vmatpush1.bf16.msra.mxu0 0
    %1727 = vmatprep.subr.bf16.mxu0 0
    %1728 = vmatpush1.bf16.msra.mxu0 0
    %1729 = vmatprep.subr.bf16.mxu0 0
    %1730 = vmatpush1.bf16.msra.mxu0 0
    %1731 = vmatprep.subr.bf16.mxu0 0
    %1732 = vmatpush1.bf16.msra.mxu0 0
    %1733 = vmatprep.subr.bf16.mxu0 0
    %1734 = vmatpush1.bf16.msra.mxu0 0
    %1735 = vmatprep.subr.bf16.mxu0 0
    %1736 = vmatpush1.bf16.msra.mxu0 0
    %1737 = vmatprep.subr.bf16.mxu0 0
    %1738 = vmatpush1.bf16.msra.mxu0 0
    %1739 = vmatprep.mubr.bf16.mxu0 %v1581
    %1740 = vmatmul.mubr.bf16.gmra.mrb[0].mxu0 %v1125
    %v1741 = vpop.f32.mrb[0].mxu0
    %v1742 = vadd.f32 %v1702, %v1741
    %v1743 = vpop.f32.mrb[0].mxu0
    %v1744 = vpop.f32.mrb[0].mxu0
    %v1745 = vpop.f32.mrb[0].mxu0
    %1746 = vdwg.mxu0
    %v1747 = vmax.f32 %v1742, 0.0
    %v1748 = vld [vmem:[#allocation7] sm:$0xff]
    %v1750 = vcombine.high %v1748, %v1748
    %v1752 = vunpack.c.l.s4 1983009808
    %v1753 = vunpack.c.0.s8 %v1752
    %v1754 = vlaneseq
    %v1755 = vshrl.u32 %v1754, 7
    %v1756 = vsub.s32 %v1753, %v1755
    %v1757 = vrot.slane %v1748, %v1756
    %v1759 = vunpack.c.l.s4 1983009808
    %v1760 = vunpack.c.0.s8 %v1759
    %v1761 = vlaneseq
    %v1762 = vshrl.u32 %v1761, 7
    %v1763 = vsub.s32 %v1760, %v1762
    %v1764 = vrot.slane %v1750, %v1763
    %v1765 = vcombine.high %v1757, %v1757
    %v1766 = vcombine.high %v1764, %v1764
    %v1771 = vpack.c.bf16 %v1757, %v1757
    %v1772 = vpack.c.bf16 %v1765, %v1765
    %v1773 = vpack.c.bf16 %v1764, %v1764
    %v1774 = vpack.c.bf16 %v1766, %v1766
    %v1775 = vld [vmem:[#allocation11] sm:$0xf]
    %v1776 = vld [vmem:[#allocation11 + $0x4] sm:$0xf]
    %v1777 = vld [vmem:[#allocation11 + $0x8] sm:$0xf]
    %v1778 = vld [vmem:[#allocation11 + $0xc] sm:$0xf]
    %v1779 = vld [vmem:[#allocation11 + $0x10] sm:$0xf]
    %v1780 = vld [vmem:[#allocation11 + $0x14] sm:$0xf]
    %v1781 = vld [vmem:[#allocation11 + $0x18] sm:$0xf]
    %v1782 = vld [vmem:[#allocation11 + $0x1c] sm:$0xf]
    %v1783 = vld [vmem:[#allocation11 + $0x20] sm:$0xf]
    %v1784 = vld [vmem:[#allocation11 + $0x24] sm:$0xf]
    %v1785 = vld [vmem:[#allocation11 + $0x28] sm:$0xf]
    %v1786 = vld [vmem:[#allocation11 + $0x2c] sm:$0xf]
    %v1787 = vld [vmem:[#allocation11 + $0x30] sm:$0xf]
    %v1788 = vld [vmem:[#allocation11 + $0x34] sm:$0xf]
    %v1789 = vld [vmem:[#allocation11 + $0x38] sm:$0xf]
    %v1790 = vld [vmem:[#allocation11 + $0x3c] sm:$0xf]
    %v1791 = vld [vmem:[#allocation11 + $0x40] sm:$0xf]
    %v1792 = vld [vmem:[#allocation11 + $0x44] sm:$0xf]
    %v1793 = vld [vmem:[#allocation11 + $0x48] sm:$0xf]
    %v1794 = vld [vmem:[#allocation11 + $0x4c] sm:$0xf]
    %v1795 = vld [vmem:[#allocation11 + $0x50] sm:$0xf]
    %v1796 = vld [vmem:[#allocation11 + $0x54] sm:$0xf]
    %v1797 = vld [vmem:[#allocation11 + $0x58] sm:$0xf]
    %v1798 = vld [vmem:[#allocation11 + $0x5c] sm:$0xf]
    %v1799 = vld [vmem:[#allocation11 + $0x60] sm:$0xf]
    %v1800 = vld [vmem:[#allocation11 + $0x64] sm:$0xf]
    %v1801 = vld [vmem:[#allocation11 + $0x68] sm:$0xf]
    %v1802 = vld [vmem:[#allocation11 + $0x6c] sm:$0xf]
    %v1803 = vld [vmem:[#allocation11 + $0x70] sm:$0xf]
    %v1804 = vld [vmem:[#allocation11 + $0x74] sm:$0xf]
    %v1805 = vld [vmem:[#allocation11 + $0x78] sm:$0xf]
    %v1806 = vld [vmem:[#allocation11 + $0x7c] sm:$0xf]
    %v1807 = vld [vmem:[#allocation11 + $0x80] sm:$0xf]
    %v1808 = vld [vmem:[#allocation11 + $0x84] sm:$0xf]
    %v1809 = vld [vmem:[#allocation11 + $0x88] sm:$0xf]
    %v1810 = vld [vmem:[#allocation11 + $0x8c] sm:$0xf]
    %v1811 = vld [vmem:[#allocation11 + $0x90] sm:$0xf]
    %v1812 = vld [vmem:[#allocation11 + $0x94] sm:$0xf]
    %v1813 = vld [vmem:[#allocation11 + $0x98] sm:$0xf]
    %v1814 = vld [vmem:[#allocation11 + $0x9c] sm:$0xf]
    %v1815 = vld [vmem:[#allocation11 + $0xa0] sm:$0xf]
    %v1816 = vld [vmem:[#allocation11 + $0xa4] sm:$0xf]
    %v1817 = vld [vmem:[#allocation11 + $0xa8] sm:$0xf]
    %v1818 = vld [vmem:[#allocation11 + $0xac] sm:$0xf]
    %v1819 = vld [vmem:[#allocation11 + $0xb0] sm:$0xf]
    %v1820 = vld [vmem:[#allocation11 + $0xb4] sm:$0xf]
    %v1821 = vld [vmem:[#allocation11 + $0xb8] sm:$0xf]
    %v1822 = vld [vmem:[#allocation11 + $0xbc] sm:$0xf]
    %v1823 = vld [vmem:[#allocation11 + $0xc0] sm:$0xf]
    %v1824 = vld [vmem:[#allocation11 + $0xc4] sm:$0xf]
    %v1825 = vld [vmem:[#allocation11 + $0xc8] sm:$0xf]
    %v1826 = vld [vmem:[#allocation11 + $0xcc] sm:$0xf]
    %v1827 = vld [vmem:[#allocation11 + $0xd0] sm:$0xf]
    %v1828 = vld [vmem:[#allocation11 + $0xd4] sm:$0xf]
    %v1829 = vld [vmem:[#allocation11 + $0xd8] sm:$0xf]
    %v1830 = vld [vmem:[#allocation11 + $0xdc] sm:$0xf]
    %v1831 = vld [vmem:[#allocation11 + $0xe0] sm:$0xf]
    %v1832 = vld [vmem:[#allocation11 + $0xe4] sm:$0xf]
    %v1833 = vld [vmem:[#allocation11 + $0xe8] sm:$0xf]
    %v1834 = vld [vmem:[#allocation11 + $0xec] sm:$0xf]
    %v1835 = vld [vmem:[#allocation11 + $0xf0] sm:$0xf]
    %v1836 = vld [vmem:[#allocation11 + $0xf4] sm:$0xf]
    %v1837 = vld [vmem:[#allocation11 + $0xf8] sm:$0x3]
    %v1901 = vunpack.c.l.b16 %v1775
    %v1902 = vunpack.c.l.b16 %v1776
    %v1903 = vunpack.c.l.b16 %v1777
    %v1904 = vunpack.c.l.b16 %v1778
    %v1905 = vunpack.c.l.b16 %v1779
    %v1906 = vunpack.c.l.b16 %v1780
    %v1907 = vunpack.c.l.b16 %v1781
    %v1908 = vunpack.c.l.b16 %v1782
    %v1909 = vunpack.c.l.b16 %v1783
    %v1910 = vunpack.c.l.b16 %v1784
    %v1911 = vunpack.c.l.b16 %v1785
    %v1912 = vunpack.c.l.b16 %v1786
    %v1913 = vunpack.c.l.b16 %v1787
    %v1914 = vunpack.c.l.b16 %v1788
    %v1915 = vunpack.c.l.b16 %v1789
    %v1916 = vunpack.c.l.b16 %v1790
    %v1917 = vunpack.c.l.b16 %v1791
    %v1918 = vunpack.c.l.b16 %v1792
    %v1919 = vunpack.c.l.b16 %v1793
    %v1920 = vunpack.c.l.b16 %v1794
    %v1921 = vunpack.c.l.b16 %v1795
    %v1922 = vunpack.c.l.b16 %v1796
    %v1923 = vunpack.c.l.b16 %v1797
    %v1924 = vunpack.c.l.b16 %v1798
    %v1925 = vunpack.c.l.b16 %v1799
    %v1926 = vunpack.c.l.b16 %v1800
    %v1927 = vunpack.c.l.b16 %v1801
    %v1928 = vunpack.c.l.b16 %v1802
    %v1929 = vunpack.c.l.b16 %v1803
    %v1930 = vunpack.c.l.b16 %v1804
    %v1931 = vunpack.c.l.b16 %v1805
    %v1932 = vunpack.c.l.b16 %v1806
    %v1933 = vunpack.c.l.b16 %v1807
    %v1934 = vunpack.c.l.b16 %v1808
    %v1935 = vunpack.c.l.b16 %v1809
    %v1936 = vunpack.c.l.b16 %v1810
    %v1937 = vunpack.c.l.b16 %v1811
    %v1938 = vunpack.c.l.b16 %v1812
    %v1939 = vunpack.c.l.b16 %v1813
    %v1940 = vunpack.c.l.b16 %v1814
    %v1941 = vunpack.c.l.b16 %v1815
    %v1942 = vunpack.c.l.b16 %v1816
    %v1943 = vunpack.c.l.b16 %v1817
    %v1944 = vunpack.c.l.b16 %v1818
    %v1945 = vunpack.c.l.b16 %v1819
    %v1946 = vunpack.c.l.b16 %v1820
    %v1947 = vunpack.c.l.b16 %v1821
    %v1948 = vunpack.c.l.b16 %v1822
    %v1949 = vunpack.c.l.b16 %v1823
    %v1950 = vunpack.c.l.b16 %v1824
    %v1951 = vunpack.c.l.b16 %v1825
    %v1952 = vunpack.c.l.b16 %v1826
    %v1953 = vunpack.c.l.b16 %v1827
    %v1954 = vunpack.c.l.b16 %v1828
    %v1955 = vunpack.c.l.b16 %v1829
    %v1956 = vunpack.c.l.b16 %v1830
    %v1957 = vunpack.c.l.b16 %v1831
    %v1958 = vunpack.c.l.b16 %v1832
    %v1959 = vunpack.c.l.b16 %v1833
    %v1960 = vunpack.c.l.b16 %v1834
    %v1961 = vunpack.c.l.b16 %v1835
    %v1962 = vunpack.c.l.b16 %v1836
    %v1963 = vunpack.c.l.b16 %v1837
    %v1964 = vpack.c.b16 %v1902, %v1901
    %v1965 = vpack.c.b16 %v1904, %v1903
    %v1966 = vpack.c.b16 %v1906, %v1905
    %v1967 = vpack.c.b16 %v1908, %v1907
    %v1968 = vpack.c.b16 %v1910, %v1909
    %v1969 = vpack.c.b16 %v1912, %v1911
    %v1970 = vpack.c.b16 %v1914, %v1913
    %v1971 = vpack.c.b16 %v1916, %v1915
    %v1972 = vpack.c.b16 %v1918, %v1917
    %v1973 = vpack.c.b16 %v1920, %v1919
    %v1974 = vpack.c.b16 %v1922, %v1921
    %v1975 = vpack.c.b16 %v1924, %v1923
    %v1976 = vpack.c.b16 %v1926, %v1925
    %v1977 = vpack.c.b16 %v1928, %v1927
    %v1978 = vpack.c.b16 %v1930, %v1929
    %v1979 = vpack.c.b16 %v1932, %v1931
    %v1980 = vpack.c.b16 %v1934, %v1933
    %v1981 = vpack.c.b16 %v1936, %v1935
    %v1982 = vpack.c.b16 %v1938, %v1937
    %v1983 = vpack.c.b16 %v1940, %v1939
    %v1984 = vpack.c.b16 %v1942, %v1941
    %v1985 = vpack.c.b16 %v1944, %v1943
    %v1986 = vpack.c.b16 %v1946, %v1945
    %v1987 = vpack.c.b16 %v1948, %v1947
    %v1988 = vpack.c.b16 %v1950, %v1949
    %v1989 = vpack.c.b16 %v1952, %v1951
    %v1990 = vpack.c.b16 %v1954, %v1953
    %v1991 = vpack.c.b16 %v1956, %v1955
    %v1992 = vpack.c.b16 %v1958, %v1957
    %v1993 = vpack.c.b16 %v1960, %v1959
    %v1994 = vpack.c.b16 %v1962, %v1961
    %v1995 = vpack.c.b16 %v1963, %v1963
    %vm2027 = vcmask 949248
    %v2029 = vsel %vm2027, %v1774, 0
    %v2032 = vsel %vm1583, %v1995, 0
    %2034 = vmatprep.subr.bf16.mxu0 0
    %2035 = vmatpush1.bf16.msra.mxu0 %v1964
    %2036 = vmatprep.subr.bf16.mxu0 0
    %2037 = vmatpush1.bf16.msra.mxu0 %v1965
    %2038 = vmatprep.subr.bf16.mxu0 0
    %2039 = vmatpush1.bf16.msra.mxu0 %v1966
    %2040 = vmatprep.subr.bf16.mxu0 0
    %2041 = vmatpush1.bf16.msra.mxu0 %v1967
    %2042 = vmatprep.subr.bf16.mxu0 0
    %2043 = vmatpush1.bf16.msra.mxu0 %v1968
    %2044 = vmatprep.subr.bf16.mxu0 0
    %2045 = vmatpush1.bf16.msra.mxu0 %v1969
    %2046 = vmatprep.subr.bf16.mxu0 0
    %2047 = vmatpush1.bf16.msra.mxu0 %v1970
    %2048 = vmatprep.subr.bf16.mxu0 0
    %2049 = vmatpush1.bf16.msra.mxu0 %v1971
    %2050 = vmatprep.subr.bf16.mxu0 0
    %2051 = vmatpush1.bf16.msra.mxu0 %v1972
    %2052 = vmatprep.subr.bf16.mxu0 0
    %2053 = vmatpush1.bf16.msra.mxu0 %v1973
    %2054 = vmatprep.subr.bf16.mxu0 0
    %2055 = vmatpush1.bf16.msra.mxu0 %v1974
    %2056 = vmatprep.subr.bf16.mxu0 0
    %2057 = vmatpush1.bf16.msra.mxu0 %v1975
    %2058 = vmatprep.subr.bf16.mxu0 0
    %2059 = vmatpush1.bf16.msra.mxu0 %v1976
    %2060 = vmatprep.subr.bf16.mxu0 0
    %2061 = vmatpush1.bf16.msra.mxu0 %v1977
    %2062 = vmatprep.subr.bf16.mxu0 0
    %2063 = vmatpush1.bf16.msra.mxu0 %v1978
    %2064 = vmatprep.subr.bf16.mxu0 0
    %2065 = vmatpush1.bf16.msra.mxu0 %v1979
    %2066 = vmatprep.mubr.bf16.mxu0 %v1772
    %2067 = vmatmul.mubr.bf16.gmra.mrb[0].mxu0 %v1771
    %v2068 = vpop.f32.mrb[0].mxu0
    %v2069 = vadd.f32 0.0, %v2068
    %v2070 = vpop.f32.mrb[0].mxu0
    %v2071 = vpop.f32.mrb[0].mxu0
    %v2072 = vpop.f32.mrb[0].mxu0
    %2073 = vdwg.mxu0
    %2074 = vmatprep.subr.bf16.mxu0 0
    %2075 = vmatpush1.bf16.msra.mxu0 %v1980
    %2076 = vmatprep.subr.bf16.mxu0 0
    %2077 = vmatpush1.bf16.msra.mxu0 %v1981
    %2078 = vmatprep.subr.bf16.mxu0 0
    %2079 = vmatpush1.bf16.msra.mxu0 %v1982
    %2080 = vmatprep.subr.bf16.mxu0 0
    %2081 = vmatpush1.bf16.msra.mxu0 %v1983
    %2082 = vmatprep.subr.bf16.mxu0 0
    %2083 = vmatpush1.bf16.msra.mxu0 %v1984
    %2084 = vmatprep.subr.bf16.mxu0 0
    %2085 = vmatpush1.bf16.msra.mxu0 %v1985
    %2086 = vmatprep.subr.bf16.mxu0 0
    %2087 = vmatpush1.bf16.msra.mxu0 %v1986
    %2088 = vmatprep.subr.bf16.mxu0 0
    %2089 = vmatpush1.bf16.msra.mxu0 %v1987
    %2090 = vmatprep.subr.bf16.mxu0 0
    %2091 = vmatpush1.bf16.msra.mxu0 %v1988
    %2092 = vmatprep.subr.bf16.mxu0 0
    %2093 = vmatpush1.bf16.msra.mxu0 %v1989
    %2094 = vmatprep.subr.bf16.mxu0 0
    %2095 = vmatpush1.bf16.msra.mxu0 %v1990
    %2096 = vmatprep.subr.bf16.mxu0 0
    %2097 = vmatpush1.bf16.msra.mxu0 %v1991
    %2098 = vmatprep.subr.bf16.mxu0 0
    %2099 = vmatpush1.bf16.msra.mxu0 %v1992
    %2100 = vmatprep.subr.bf16.mxu0 0
    %2101 = vmatpush1.bf16.msra.mxu0 %v1993
    %2102 = vmatprep.subr.bf16.mxu0 0
    %2103 = vmatpush1.bf16.msra.mxu0 %v1994
    %2104 = vmatprep.subr.bf16.mxu0 0
    %2105 = vmatpush1.bf16.msra.mxu0 %v2032
    %2106 = vmatprep.mubr.bf16.mxu0 %v2029
    %2107 = vmatmul.mubr.bf16.gmra.mrb[0].mxu0 %v1773
    %v2108 = vpop.f32.mrb[0].mxu0
    %v2109 = vadd.f32 %v2069, %v2108
    %v2110 = vpop.f32.mrb[0].mxu0
    %v2111 = vpop.f32.mrb[0].mxu0
    %v2112 = vpop.f32.mrb[0].mxu0
    %2113 = vdwg.mxu0
    %v2114 = vmax.f32 %v2109, 0.0
    %v2115 = vld [vmem:[#allocation13] sm:$0xff]
    %v2116 = vld [vmem:[#allocation13 + $0x8] sm:$0xff]
    %v2117 = vld [vmem:[#allocation13 + $0x10] sm:$0xff]
    %v2118 = vld [vmem:[#allocation13 + $0x18] sm:$0xff]
    %v2119 = vld [vmem:[#allocation13 + $0x20] sm:$0xff]
    %v2120 = vld [vmem:[#allocation13 + $0x28] sm:$0xff]
    %v2121 = vld [vmem:[#allocation13 + $0x30] sm:$0xff]
    %v2122 = vld [vmem:[#allocation13 + $0x38] sm:$0xff]
    %v2123 = vld [vmem:[#allocation13 + $0x40] sm:$0xff]
    %v2124 = vld [vmem:[#allocation13 + $0x48] sm:$0xff]
    %v2125 = vld [vmem:[#allocation13 + $0x50] sm:$0xff]
    %v2126 = vld [vmem:[#allocation13 + $0x58] sm:$0xff]
    %v2127 = vld [vmem:[#allocation13 + $0x60] sm:$0xff]
    %v2128 = vld [vmem:[#allocation13 + $0x68] sm:$0xff]
    %v2129 = vld [vmem:[#allocation13 + $0x70] sm:$0xff]
    %v2130 = vld [vmem:[#allocation13 + $0x78] sm:$0xff]
    %v2131 = vld [vmem:[#allocation14] sm:$0xff]
    %v2132 = vld [vmem:[#allocation14 + $0x8] sm:$0xff]
    %v2133 = vld [vmem:[#allocation14 + $0x10] sm:$0xff]
    %v2134 = vld [vmem:[#allocation14 + $0x18] sm:$0xff]
    %v2135 = vld [vmem:[#allocation14 + $0x20] sm:$0xff]
    %v2136 = vld [vmem:[#allocation14 + $0x28] sm:$0xff]
    %v2137 = vld [vmem:[#allocation14 + $0x30] sm:$0xff]
    %v2138 = vld [vmem:[#allocation14 + $0x38] sm:$0xff]
    %v2139 = vld [vmem:[#allocation14 + $0x40] sm:$0xff]
    %v2140 = vld [vmem:[#allocation14 + $0x48] sm:$0xff]
    %v2141 = vld [vmem:[#allocation14 + $0x50] sm:$0xff]
    %v2142 = vld [vmem:[#allocation14 + $0x58] sm:$0xff]
    %v2143 = vld [vmem:[#allocation14 + $0x60] sm:$0xff]
    %v2144 = vld [vmem:[#allocation14 + $0x68] sm:$0xff]
    %v2145 = vld [vmem:[#allocation14 + $0x70] sm:$0xff]
    %v2146 = vld [vmem:[#allocation14 + $0x78] sm:$0xff]
    %2147 = vmatprep.subr.mxu0 0.0
    %2148 = vmatpush1.msra.mxu0 %v2131
    %2149 = vmatprep.subr.mxu0 0.0
    %2150 = vmatpush1.msra.mxu0 %v2132
    %2151 = vmatprep.subr.mxu0 0.0
    %2152 = vmatpush1.msra.mxu0 %v2133
    %2153 = vmatprep.subr.mxu0 0.0
    %2154 = vmatpush1.msra.mxu0 %v2134
    %2155 = vmatprep.subr.mxu0 0.0
    %2156 = vmatpush1.msra.mxu0 %v2135
    %2157 = vmatprep.subr.mxu0 0.0
    %2158 = vmatpush1.msra.mxu0 %v2136
    %2159 = vmatprep.subr.mxu0 0.0
    %2160 = vmatpush1.msra.mxu0 %v2137
    %2161 = vmatprep.subr.mxu0 0.0
    %2162 = vmatpush1.msra.mxu0 %v2138
    %2163 = vmatprep.subr.mxu0 0.0
    %2164 = vmatpush1.msra.mxu0 %v2139
    %2165 = vmatprep.subr.mxu0 0.0
    %2166 = vmatpush1.msra.mxu0 %v2140
    %2167 = vmatprep.subr.mxu0 0.0
    %2168 = vmatpush1.msra.mxu0 %v2141
    %2169 = vmatprep.subr.mxu0 0.0
    %2170 = vmatpush1.msra.mxu0 %v2142
    %2171 = vmatprep.subr.mxu0 0.0
    %2172 = vmatpush1.msra.mxu0 %v2143
    %2173 = vmatprep.subr.mxu0 0.0
    %2174 = vmatpush1.msra.mxu0 %v2144
    %2175 = vmatprep.subr.mxu0 0.0
    %2176 = vmatpush1.msra.mxu0 %v2145
    %2177 = vmatprep.subr.mxu0 0.0
    %2178 = vmatpush1.msra.mxu0 %v2146
    %2179 = vmatprep.subr.mxu0 0.0
    %2180 = vmatpush1.msra.mxu0 0.0
    %2181 = vmatprep.subr.mxu0 0.0
    %2182 = vmatpush1.msra.mxu0 0.0
    %2183 = vmatprep.subr.mxu0 0.0
    %2184 = vmatpush1.msra.mxu0 0.0
    %2185 = vmatprep.subr.mxu0 0.0
    %2186 = vmatpush1.msra.mxu0 0.0
    %2187 = vmatprep.subr.mxu0 0.0
    %2188 = vmatpush1.msra.mxu0 0.0
    %2189 = vmatprep.subr.mxu0 0.0
    %2190 = vmatpush1.msra.mxu0 0.0
    %2191 = vmatprep.subr.mxu0 0.0
    %2192 = vmatpush1.msra.mxu0 0.0
    %2193 = vmatprep.subr.mxu0 0.0
    %2194 = vmatpush1.msra.mxu0 0.0
    %2195 = vmatprep.subr.mxu0 0.0
    %2196 = vmatpush1.msra.mxu0 0.0
    %2197 = vmatprep.subr.mxu0 0.0
    %2198 = vmatpush1.msra.mxu0 0.0
    %2199 = vmatprep.subr.mxu0 0.0
    %2200 = vmatpush1.msra.mxu0 0.0
    %2201 = vmatprep.subr.mxu0 0.0
    %2202 = vmatpush1.msra.mxu0 0.0
    %2203 = vmatprep.subr.mxu0 0.0
    %2204 = vmatpush1.msra.mxu0 0.0
    %2205 = vmatprep.subr.mxu0 0.0
    %2206 = vmatpush1.msra.mxu0 0.0
    %2207 = vmatprep.subr.mxu0 0.0
    %2208 = vmatpush1.msra.mxu0 0.0
    %2209 = vmatprep.subr.mxu0 0.0
    %2210 = vmatpush1.msra.mxu0 0.0
    %2211 = vmatprep.mubr.f32.mxu0 0.0
    %2212 = vmatmul.mubr.f32.gmra.mrb[0].mxu0 %v1747
    %v2213 = vpop.f32.mrb[0].mxu0
    %v2214 = vadd.f32 0.0, %v2213
    %v2215 = vpop.f32.mrb[0].mxu0
    %2216 = vdwg.mxu0
    %2217 = vmatprep.subr.mxu0 0.0
    %2218 = vmatpush1.msra.mxu0 %v2115
    %2219 = vmatprep.subr.mxu0 0.0
    %2220 = vmatpush1.msra.mxu0 %v2116
    %2221 = vmatprep.subr.mxu0 0.0
    %2222 = vmatpush1.msra.mxu0 %v2117
    %2223 = vmatprep.subr.mxu0 0.0
    %2224 = vmatpush1.msra.mxu0 %v2118
    %2225 = vmatprep.subr.mxu0 0.0
    %2226 = vmatpush1.msra.mxu0 %v2119
    %2227 = vmatprep.subr.mxu0 0.0
    %2228 = vmatpush1.msra.mxu0 %v2120
    %2229 = vmatprep.subr.mxu0 0.0
    %2230 = vmatpush1.msra.mxu0 %v2121
    %2231 = vmatprep.subr.mxu0 0.0
    %2232 = vmatpush1.msra.mxu0 %v2122
    %2233 = vmatprep.subr.mxu0 0.0
    %2234 = vmatpush1.msra.mxu0 %v2123
    %2235 = vmatprep.subr.mxu0 0.0
    %2236 = vmatpush1.msra.mxu0 %v2124
    %2237 = vmatprep.subr.mxu0 0.0
    %2238 = vmatpush1.msra.mxu0 %v2125
    %2239 = vmatprep.subr.mxu0 0.0
    %2240 = vmatpush1.msra.mxu0 %v2126
    %2241 = vmatprep.subr.mxu0 0.0
    %2242 = vmatpush1.msra.mxu0 %v2127
    %2243 = vmatprep.subr.mxu0 0.0
    %2244 = vmatpush1.msra.mxu0 %v2128
    %2245 = vmatprep.subr.mxu0 0.0
    %2246 = vmatpush1.msra.mxu0 %v2129
    %2247 = vmatprep.subr.mxu0 0.0
    %2248 = vmatpush1.msra.mxu0 %v2130
    %2249 = vmatprep.subr.mxu0 0.0
    %2250 = vmatpush1.msra.mxu0 0.0
    %2251 = vmatprep.subr.mxu0 0.0
    %2252 = vmatpush1.msra.mxu0 0.0
    %2253 = vmatprep.subr.mxu0 0.0
    %2254 = vmatpush1.msra.mxu0 0.0
    %2255 = vmatprep.subr.mxu0 0.0
    %2256 = vmatpush1.msra.mxu0 0.0
    %2257 = vmatprep.subr.mxu0 0.0
    %2258 = vmatpush1.msra.mxu0 0.0
    %2259 = vmatprep.subr.mxu0 0.0
    %2260 = vmatpush1.msra.mxu0 0.0
    %2261 = vmatprep.subr.mxu0 0.0
    %2262 = vmatpush1.msra.mxu0 0.0
    %2263 = vmatprep.subr.mxu0 0.0
    %2264 = vmatpush1.msra.mxu0 0.0
    %2265 = vmatprep.subr.mxu0 0.0
    %2266 = vmatpush1.msra.mxu0 0.0
    %2267 = vmatprep.subr.mxu0 0.0
    %2268 = vmatpush1.msra.mxu0 0.0
    %2269 = vmatprep.subr.mxu0 0.0
    %2270 = vmatpush1.msra.mxu0 0.0
    %2271 = vmatprep.subr.mxu0 0.0
    %2272 = vmatpush1.msra.mxu0 0.0
    %2273 = vmatprep.subr.mxu0 0.0
    %2274 = vmatpush1.msra.mxu0 0.0
    %2275 = vmatprep.subr.mxu0 0.0
    %2276 = vmatpush1.msra.mxu0 0.0
    %2277 = vmatprep.subr.mxu0 0.0
    %2278 = vmatpush1.msra.mxu0 0.0
    %2279 = vmatprep.subr.mxu0 0.0
    %2280 = vmatpush1.msra.mxu0 0.0
    %2281 = vmatprep.mubr.f32.mxu0 0.0
    %2282 = vmatmul.mubr.f32.gmra.mrb[0].mxu0 %v1072
    %v2283 = vpop.f32.mrb[0].mxu0
    %v2284 = vadd.f32 %v2214, %v2283
    %v2285 = vpop.f32.mrb[0].mxu0
    %2286 = vdwg.mxu0
    %v2287 = vld [vmem:[#allocation16] sm:$0xff]
    %v2288 = vld [vmem:[#allocation16 + $0x8] sm:$0xff]
    %v2289 = vld [vmem:[#allocation16 + $0x10] sm:$0xff]
    %v2290 = vld [vmem:[#allocation16 + $0x18] sm:$0xff]
    %v2291 = vld [vmem:[#allocation16 + $0x20] sm:$0xff]
    %v2292 = vld [vmem:[#allocation16 + $0x28] sm:$0xff]
    %v2293 = vld [vmem:[#allocation16 + $0x30] sm:$0xff]
    %v2294 = vld [vmem:[#allocation16 + $0x38] sm:$0xff]
    %v2295 = vld [vmem:[#allocation16 + $0x40] sm:$0xff]
    %v2296 = vld [vmem:[#allocation16 + $0x48] sm:$0xff]
    %v2297 = vld [vmem:[#allocation16 + $0x50] sm:$0xff]
    %v2298 = vld [vmem:[#allocation16 + $0x58] sm:$0xff]
    %v2299 = vld [vmem:[#allocation16 + $0x60] sm:$0xff]
    %v2300 = vld [vmem:[#allocation16 + $0x68] sm:$0xff]
    %v2301 = vld [vmem:[#allocation16 + $0x70] sm:$0xff]
    %v2302 = vld [vmem:[#allocation16 + $0x78] sm:$0xff]
    %2303 = vmatprep.subr.mxu0 0.0
    %2304 = vmatpush1.msra.mxu0 %v2287
    %2305 = vmatprep.subr.mxu0 0.0
    %2306 = vmatpush1.msra.mxu0 %v2288
    %2307 = vmatprep.subr.mxu0 0.0
    %2308 = vmatpush1.msra.mxu0 %v2289
    %2309 = vmatprep.subr.mxu0 0.0
    %2310 = vmatpush1.msra.mxu0 %v2290
    %2311 = vmatprep.subr.mxu0 0.0
    %2312 = vmatpush1.msra.mxu0 %v2291
    %2313 = vmatprep.subr.mxu0 0.0
    %2314 = vmatpush1.msra.mxu0 %v2292
    %2315 = vmatprep.subr.mxu0 0.0
    %2316 = vmatpush1.msra.mxu0 %v2293
    %2317 = vmatprep.subr.mxu0 0.0
    %2318 = vmatpush1.msra.mxu0 %v2294
    %2319 = vmatprep.subr.mxu0 0.0
    %2320 = vmatpush1.msra.mxu0 %v2295
    %2321 = vmatprep.subr.mxu0 0.0
    %2322 = vmatpush1.msra.mxu0 %v2296
    %2323 = vmatprep.subr.mxu0 0.0
    %2324 = vmatpush1.msra.mxu0 %v2297
    %2325 = vmatprep.subr.mxu0 0.0
    %2326 = vmatpush1.msra.mxu0 %v2298
    %2327 = vmatprep.subr.mxu0 0.0
    %2328 = vmatpush1.msra.mxu0 %v2299
    %2329 = vmatprep.subr.mxu0 0.0
    %2330 = vmatpush1.msra.mxu0 %v2300
    %2331 = vmatprep.subr.mxu0 0.0
    %2332 = vmatpush1.msra.mxu0 %v2301
    %2333 = vmatprep.subr.mxu0 0.0
    %2334 = vmatpush1.msra.mxu0 %v2302
    %2335 = vmatprep.subr.mxu0 0.0
    %2336 = vmatpush1.msra.mxu0 0.0
    %2337 = vmatprep.subr.mxu0 0.0
    %2338 = vmatpush1.msra.mxu0 0.0
    %2339 = vmatprep.subr.mxu0 0.0
    %2340 = vmatpush1.msra.mxu0 0.0
    %2341 = vmatprep.subr.mxu0 0.0
    %2342 = vmatpush1.msra.mxu0 0.0
    %2343 = vmatprep.subr.mxu0 0.0
    %2344 = vmatpush1.msra.mxu0 0.0
    %2345 = vmatprep.subr.mxu0 0.0
    %2346 = vmatpush1.msra.mxu0 0.0
    %2347 = vmatprep.subr.mxu0 0.0
    %2348 = vmatpush1.msra.mxu0 0.0
    %2349 = vmatprep.subr.mxu0 0.0
    %2350 = vmatpush1.msra.mxu0 0.0
    %2351 = vmatprep.subr.mxu0 0.0
    %2352 = vmatpush1.msra.mxu0 0.0
    %2353 = vmatprep.subr.mxu0 0.0
    %2354 = vmatpush1.msra.mxu0 0.0
    %2355 = vmatprep.subr.mxu0 0.0
    %2356 = vmatpush1.msra.mxu0 0.0
    %2357 = vmatprep.subr.mxu0 0.0
    %2358 = vmatpush1.msra.mxu0 0.0
    %2359 = vmatprep.subr.mxu0 0.0
    %2360 = vmatpush1.msra.mxu0 0.0
    %2361 = vmatprep.subr.mxu0 0.0
    %2362 = vmatpush1.msra.mxu0 0.0
    %2363 = vmatprep.subr.mxu0 0.0
    %2364 = vmatpush1.msra.mxu0 0.0
    %2365 = vmatprep.subr.mxu0 0.0
    %2366 = vmatpush1.msra.mxu0 0.0
    %2367 = vmatprep.mubr.f32.mxu0 0.0
    %2368 = vmatmul.mubr.f32.gmra.mrb[0].mxu0 %v2114
    %v2369 = vpop.f32.mrb[0].mxu0
    %v2370 = vadd.f32 0.0, %v2369
    %v2371 = vpop.f32.mrb[0].mxu0
    %2372 = vdwg.mxu0
    %v2373 = vadd.f32 %v2284, %v2370
    %v2374 = vld [vmem:[%s9] sm:$0x1]
    %v2376 = vlaneseq
    %v2377 = vshrl.u32 %v2376, 7
    %v2378 = vsub.s32 0, %v2377
    %v2379 = vrot.slane %v2374, %v2378
    %v2381 = vadd.f32 %v2373, %v2379
    %v2382 = vmax.f32 %v2381, 0.0
    %v2383 = vld [vmem:[#allocation17] sm:$0xff]
    %v2384 = vld [vmem:[#allocation17 + $0x8] sm:$0xff]
    %v2385 = vld [vmem:[#allocation17 + $0x10] sm:$0xff]
    %v2386 = vld [vmem:[#allocation17 + $0x18] sm:$0xff]
    %v2387 = vld [vmem:[#allocation17 + $0x20] sm:$0xff]
    %v2388 = vld [vmem:[#allocation17 + $0x28] sm:$0xff]
    %v2389 = vld [vmem:[#allocation17 + $0x30] sm:$0xff]
    %v2390 = vld [vmem:[#allocation17 + $0x38] sm:$0xff]
    %v2391 = vld [vmem:[#allocation17 + $0x40] sm:$0xff]
    %v2392 = vld [vmem:[#allocation17 + $0x48] sm:$0xff]
    %v2393 = vld [vmem:[#allocation17 + $0x50] sm:$0xff]
    %v2394 = vld [vmem:[#allocation17 + $0x58] sm:$0xff]
    %v2395 = vld [vmem:[#allocation17 + $0x60] sm:$0xff]
    %v2396 = vld [vmem:[#allocation17 + $0x68] sm:$0xff]
    %v2397 = vld [vmem:[#allocation17 + $0x70] sm:$0xff]
    %v2398 = vld [vmem:[#allocation17 + $0x78] sm:$0xff]
    %v2399 = vld [vmem:[%s11] sm:$0x1]
    %v2401 = vlaneseq
    %v2402 = vshrl.u32 %v2401, 7
    %v2403 = vsub.s32 0, %v2402
    %v2404 = vrot.slane %v2399, %v2403
    %2406 = vmatprep.subr.mxu0 0.0
    %2407 = vmatpush1.msra.mxu0 %v2383
    %2408 = vmatprep.subr.mxu0 0.0
    %2409 = vmatpush1.msra.mxu0 %v2384
    %2410 = vmatprep.subr.mxu0 0.0
    %2411 = vmatpush1.msra.mxu0 %v2385
    %2412 = vmatprep.subr.mxu0 0.0
    %2413 = vmatpush1.msra.mxu0 %v2386
    %2414 = vmatprep.subr.mxu0 0.0
    %2415 = vmatpush1.msra.mxu0 %v2387
    %2416 = vmatprep.subr.mxu0 0.0
    %2417 = vmatpush1.msra.mxu0 %v2388
    %2418 = vmatprep.subr.mxu0 0.0
    %2419 = vmatpush1.msra.mxu0 %v2389
    %2420 = vmatprep.subr.mxu0 0.0
    %2421 = vmatpush1.msra.mxu0 %v2390
    %2422 = vmatprep.subr.mxu0 0.0
    %2423 = vmatpush1.msra.mxu0 %v2391
    %2424 = vmatprep.subr.mxu0 0.0
    %2425 = vmatpush1.msra.mxu0 %v2392
    %2426 = vmatprep.subr.mxu0 0.0
    %2427 = vmatpush1.msra.mxu0 %v2393
    %2428 = vmatprep.subr.mxu0 0.0
    %2429 = vmatpush1.msra.mxu0 %v2394
    %2430 = vmatprep.subr.mxu0 0.0
    %2431 = vmatpush1.msra.mxu0 %v2395
    %2432 = vmatprep.subr.mxu0 0.0
    %2433 = vmatpush1.msra.mxu0 %v2396
    %2434 = vmatprep.subr.mxu0 0.0
    %2435 = vmatpush1.msra.mxu0 %v2397
    %2436 = vmatprep.subr.mxu0 0.0
    %2437 = vmatpush1.msra.mxu0 %v2398
    %2438 = vmatprep.subr.mxu0 0.0
    %2439 = vmatpush1.msra.mxu0 0.0
    %2440 = vmatprep.subr.mxu0 0.0
    %2441 = vmatpush1.msra.mxu0 0.0
    %2442 = vmatprep.subr.mxu0 0.0
    %2443 = vmatpush1.msra.mxu0 0.0
    %2444 = vmatprep.subr.mxu0 0.0
    %2445 = vmatpush1.msra.mxu0 0.0
    %2446 = vmatprep.subr.mxu0 0.0
    %2447 = vmatpush1.msra.mxu0 0.0
    %2448 = vmatprep.subr.mxu0 0.0
    %2449 = vmatpush1.msra.mxu0 0.0
    %2450 = vmatprep.subr.mxu0 0.0
    %2451 = vmatpush1.msra.mxu0 0.0
    %2452 = vmatprep.subr.mxu0 0.0
    %2453 = vmatpush1.msra.mxu0 0.0
    %2454 = vmatprep.subr.mxu0 0.0
    %2455 = vmatpush1.msra.mxu0 0.0
    %2456 = vmatprep.subr.mxu0 0.0
    %2457 = vmatpush1.msra.mxu0 0.0
    %2458 = vmatprep.subr.mxu0 0.0
    %2459 = vmatpush1.msra.mxu0 0.0
    %2460 = vmatprep.subr.mxu0 0.0
    %2461 = vmatpush1.msra.mxu0 0.0
    %2462 = vmatprep.subr.mxu0 0.0
    %2463 = vmatpush1.msra.mxu0 0.0
    %2464 = vmatprep.subr.mxu0 0.0
    %2465 = vmatpush1.msra.mxu0 0.0
    %2466 = vmatprep.subr.mxu0 0.0
    %2467 = vmatpush1.msra.mxu0 0.0
    %2468 = vmatprep.subr.mxu0 0.0
    %2469 = vmatpush1.msra.mxu0 0.0
    %2470 = vmatprep.mubr.f32.mxu0 0.0
    %2471 = vmatmul.mubr.f32.gmra.mrb[0].mxu0 %v2382
    %v2472 = vpop.f32.mrb[0].mxu0
    %v2473 = vadd.f32 %v2404, %v2472
    %v2474 = vpop.f32.mrb[0].mxu0
    %2475 = vdwg.mxu0
    %v2476 = vmax.f32 %v2473, 0.0
    %v2477 = vld [vmem:[#allocation19] sm:$0xff]
    %v2478 = vld [vmem:[#allocation19 + $0x8] sm:$0xff]
    %v2479 = vld [vmem:[#allocation19 + $0x10] sm:$0xff]
    %v2480 = vld [vmem:[#allocation19 + $0x18] sm:$0xff]
    %v2481 = vld [vmem:[#allocation19 + $0x20] sm:$0xff]
    %v2482 = vld [vmem:[#allocation19 + $0x28] sm:$0xff]
    %v2483 = vld [vmem:[#allocation19 + $0x30] sm:$0xff]
    %v2484 = vld [vmem:[#allocation19 + $0x38] sm:$0xff]
    %v2485 = vld [vmem:[#allocation19 + $0x40] sm:$0xff]
    %v2486 = vld [vmem:[#allocation19 + $0x48] sm:$0xff]
    %v2487 = vld [vmem:[#allocation19 + $0x50] sm:$0xff]
    %v2488 = vld [vmem:[#allocation19 + $0x58] sm:$0xff]
    %v2489 = vld [vmem:[#allocation19 + $0x60] sm:$0xff]
    %v2490 = vld [vmem:[#allocation19 + $0x68] sm:$0xff]
    %v2491 = vld [vmem:[#allocation19 + $0x70] sm:$0xff]
    %v2492 = vld [vmem:[#allocation19 + $0x78] sm:$0xff]
    %v2493 = vld [vmem:[%s13] sm:$0x1]
    %v2495 = vlaneseq
    %v2496 = vshrl.u32 %v2495, 7
    %v2497 = vsub.s32 0, %v2496
    %v2498 = vrot.slane %v2493, %v2497
    %2500 = vmatprep.subr.mxu0 0.0
    %2501 = vmatpush1.msra.mxu0 %v2477
    %2502 = vmatprep.subr.mxu0 0.0
    %2503 = vmatpush1.msra.mxu0 %v2478
    %2504 = vmatprep.subr.mxu0 0.0
    %2505 = vmatpush1.msra.mxu0 %v2479
    %2506 = vmatprep.subr.mxu0 0.0
    %2507 = vmatpush1.msra.mxu0 %v2480
    %2508 = vmatprep.subr.mxu0 0.0
    %2509 = vmatpush1.msra.mxu0 %v2481
    %2510 = vmatprep.subr.mxu0 0.0
    %2511 = vmatpush1.msra.mxu0 %v2482
    %2512 = vmatprep.subr.mxu0 0.0
    %2513 = vmatpush1.msra.mxu0 %v2483
    %2514 = vmatprep.subr.mxu0 0.0
    %2515 = vmatpush1.msra.mxu0 %v2484
    %2516 = vmatprep.subr.mxu0 0.0
    %2517 = vmatpush1.msra.mxu0 %v2485
    %2518 = vmatprep.subr.mxu0 0.0
    %2519 = vmatpush1.msra.mxu0 %v2486
    %2520 = vmatprep.subr.mxu0 0.0
    %2521 = vmatpush1.msra.mxu0 %v2487
    %2522 = vmatprep.subr.mxu0 0.0
    %2523 = vmatpush1.msra.mxu0 %v2488
    %2524 = vmatprep.subr.mxu0 0.0
    %2525 = vmatpush1.msra.mxu0 %v2489
    %2526 = vmatprep.subr.mxu0 0.0
    %2527 = vmatpush1.msra.mxu0 %v2490
    %2528 = vmatprep.subr.mxu0 0.0
    %2529 = vmatpush1.msra.mxu0 %v2491
    %2530 = vmatprep.subr.mxu0 0.0
    %2531 = vmatpush1.msra.mxu0 %v2492
    %2532 = vmatprep.subr.mxu0 0.0
    %2533 = vmatpush1.msra.mxu0 0.0
    %2534 = vmatprep.subr.mxu0 0.0
    %2535 = vmatpush1.msra.mxu0 0.0
    %2536 = vmatprep.subr.mxu0 0.0
    %2537 = vmatpush1.msra.mxu0 0.0
    %2538 = vmatprep.subr.mxu0 0.0
    %2539 = vmatpush1.msra.mxu0 0.0
    %2540 = vmatprep.subr.mxu0 0.0
    %2541 = vmatpush1.msra.mxu0 0.0
    %2542 = vmatprep.subr.mxu0 0.0
    %2543 = vmatpush1.msra.mxu0 0.0
    %2544 = vmatprep.subr.mxu0 0.0
    %2545 = vmatpush1.msra.mxu0 0.0
    %2546 = vmatprep.subr.mxu0 0.0
    %2547 = vmatpush1.msra.mxu0 0.0
    %2548 = vmatprep.subr.mxu0 0.0
    %2549 = vmatpush1.msra.mxu0 0.0
    %2550 = vmatprep.subr.mxu0 0.0
    %2551 = vmatpush1.msra.mxu0 0.0
    %2552 = vmatprep.subr.mxu0 0.0
    %2553 = vmatpush1.msra.mxu0 0.0
    %2554 = vmatprep.subr.mxu0 0.0
    %2555 = vmatpush1.msra.mxu0 0.0
    %2556 = vmatprep.subr.mxu0 0.0
    %2557 = vmatpush1.msra.mxu0 0.0
    %2558 = vmatprep.subr.mxu0 0.0
    %2559 = vmatpush1.msra.mxu0 0.0
    %2560 = vmatprep.subr.mxu0 0.0
    %2561 = vmatpush1.msra.mxu0 0.0
    %2562 = vmatprep.subr.mxu0 0.0
    %2563 = vmatpush1.msra.mxu0 0.0
    %2564 = vmatprep.mubr.f32.mxu0 0.0
    %2565 = vmatmul.mubr.f32.gmra.mrb[0].mxu0 %v2476
    %v2566 = vpop.f32.mrb[0].mxu0
    %v2567 = vadd.f32 %v2498, %v2566
    %v2568 = vpop.f32.mrb[0].mxu0
    %2569 = vdwg.mxu0
    %v2570 = vmul.f32 %v2567, %v2567
    %v2571 = vsel %vm1583, %v2570, 0.0
    %2572 = vadd.xlane.f32.xlu0 %v2571
    %v2573 = vpop.xlane.xlu0 %2572
    %v2574 = vmax.f32 %v2573, 1e-24
    %v2575 = vrsqrt.pop %v2574
    %v2576 = vmul.f32 %v2567, %v2575
    %2577 = vst [vmem:[#allocation20] sm:$0x3] %v2576
    // Predicated region
    $region102: #{tpu_custom_call.1} parent=1 // pred_check
      _
    $region103: #{tpu_custom_call.1} parent=1 // pred_check_branch
      %2579 = sbr.rel (0) target = $region105
    $region104: #{tpu_custom_call.1} parent=1 // pred_region
      %s2581 = ssub.s32 32, 32
      %2582 = vsyncadd [#allocation4], %s2581
      %s2584 = sshll.u32 [#allocation20], 4
      %s2585 = int_to_ptr.vmem [resolvable:$true] %s2584
      %2587 = dma.vmem_to_hbm [thread:$0]  %s2585, 32, %s14, [#allocation4]
    $region105: #{tpu_custom_call.1} parent=1 // pred_fallthru
      _
    // Predicated region
    $region106: #{tpu_custom_call.1} parent=1 // pred_check
      _
    $region107: #{tpu_custom_call.1} parent=1 // pred_check_branch
      %2589 = sbr.rel (0) target = $region109
    $region108: #{tpu_custom_call.1} parent=1 // pred_region
      %2590 = dma.done [#allocation4], 32
    $region109: #{tpu_custom_call.1} parent=1 // pred_fallthru
      _
    %2591 = vsyncpa [#allocation3], 1
    %2592 = vsyncpa [#allocation6], 1
    %2593 = vsyncpa [#allocation9], 1
    %2594 = vsyncpa [#allocation12], 1
    %2595 = vsyncpa [#allocation15], 1
    %2596 = vsyncpa [#allocation18], 1
    %2597 = vsyncpa [#allocation4], 1

</llo_original>
